<compile_context>
chip_gen: v7x
topology: tpu7x:2x2x1
jax: 0.10.0
libtpu: 0.0.40
codegen_flags: <defaults>
</compile_context>

<pallas_src>
import jax
import jax.numpy as jnp
from jax.experimental import pallas as pl
from jax.experimental.pallas import tpu as pltpu


def _upsample_kernel(x_ref, w_ref, p_ref, o_ref, xpad_ref, patch_ref):
    """Fused 3x3 conv (no bias) + PixelShuffle(2) for one (image, out-channel).

    x_ref     : (1, H, Cin, W)      input image, W on lanes
    w_ref     : (1, 4, 9*Cin)       weight rows ordered r = j*2 + i for this out_ch
    p_ref     : (2, W, 2*W)         lane-scatter matrices: p[j, w, 2w+j] = 1
    o_ref     : (1, 1, H, 2, 2*W)   output block, [0,0,h,i,2w+j] = y[c, 2h+i, 2w+j]
    xpad_ref  : (H+2, Cin, W+2)     zero-padded input scratch (VMEM)
    patch_ref : (H, 9*Cin, W)       im2col patches scratch (VMEM)
    """
    H = x_ref.shape[1]
    Cin = x_ref.shape[2]
    W = x_ref.shape[3]
    K = 9 * Cin

    # --- in-kernel zero padding (padding=1 on H and W), no HBM pre-pass ---
    xpad_ref[...] = jnp.zeros_like(xpad_ref)
    xpad_ref[1:H + 1, :, 1:W + 1] = x_ref[0]

    # --- im2col: stack the 9 shifted taps along the contraction axis ---
    for dy in range(3):
        for dx in range(3):
            t = dy * 3 + dx
            patch_ref[:, t * Cin:(t + 1) * Cin, :] = (
                xpad_ref[dy:dy + H, :, dx:dx + W])

    # --- one conv matmul, K = 9*Cin, batched over rows h, f32 accumulation ---
    wb = jnp.broadcast_to(w_ref[0], (H, 4, K))                  # (H, 4, K)
    conv = jnp.einsum('hok,hkw->how', wb, patch_ref[...],
                      preferred_element_type=jnp.float32)       # (H, 4, W)
    # rows r of `conv`: r = j*2 + i  (j = sub-pixel column, i = sub-pixel row)

    # --- fused PixelShuffle: scatter column w to output lanes 2w / 2w+1 ---
    out = (jnp.einsum('hiw,wx->hix', conv[:, 0:2, :], p_ref[0],
                      preferred_element_type=jnp.float32) +
           jnp.einsum('hiw,wx->hix', conv[:, 2:4, :], p_ref[1],
                      preferred_element_type=jnp.float32))      # (H, 2, 2W)
    o_ref[0, 0] = out.astype(o_ref.dtype)


def upsample_forward(x_nchw, weight_oihw, out_ch):
    """Matches PyTorch Upsample.forward.

    x_nchw      : (N, in_ch, H, W)
    weight_oihw : (out_ch*4, in_ch, 3, 3)   -- PyTorch Conv2d weight layout
    returns     : (N, out_ch, 2H, 2W)
    """
    N, Cin, H, W = x_nchw.shape
    K = 9 * Cin
    dtype = x_nchw.dtype
    assert weight_oihw.shape == (out_ch * 4, Cin, 3, 3)

    # Input with W on lanes: (N, H, Cin, W).  Small one-pass transpose.
    # TODO(synk): could be fused into the kernel to remove this last XLA pass.
    x_hcw = jnp.transpose(x_nchw, (0, 2, 1, 3))

    # Weight: (4*out_ch, Cin, 3, 3) -> (out_ch, 4, 9*Cin)
    #   k ordered (dy, dx, ci) to match the im2col layout,
    #   rows ordered r = j*2 + i (PixelShuffle sub-pixel index (i, j)).
    w = jnp.transpose(weight_oihw, (0, 2, 3, 1)).reshape(out_ch * 4, K)  # [oc, k]
    w = w.reshape(out_ch, 2, 2, K)          # (c, i, j, k)
    w = jnp.transpose(w, (0, 2, 1, 3))      # (c, j, i, k)
    w = w.reshape(out_ch, 4, K).astype(dtype)

    # Lane-scatter (pixel-shuffle) matrices: p[j, w, 2w+j] = 1.
    wi = jax.lax.broadcasted_iota(jnp.int32, (W, 2 * W), 0)
    xi = jax.lax.broadcasted_iota(jnp.int32, (W, 2 * W), 1)
    p = jnp.stack([(xi == 2 * wi), (xi == 2 * wi + 1)]).astype(dtype)  # (2, W, 2W)

    out5 = pl.pallas_call(
        _upsample_kernel,
        out_shape=jax.ShapeDtypeStruct((N, out_ch, H, 2, 2 * W), dtype),
        grid_spec=pltpu.PrefetchScalarGridSpec(
            num_scalar_prefetch=0,
            grid=(N, out_ch),
            in_specs=[
                pl.BlockSpec((1, H, Cin, W), lambda n, c: (n, 0, 0, 0)),
                pl.BlockSpec((1, 4, K), lambda n, c: (c, 0, 0)),
                pl.BlockSpec((2, W, 2 * W), lambda n, c: (0, 0, 0)),
            ],
            out_specs=pl.BlockSpec((1, 1, H, 2, 2 * W),
                                   lambda n, c: (n, c, 0, 0, 0)),
            scratch_shapes=[
                pltpu.VMEM((H + 2, Cin, W + 2), dtype),   # padded input
                pltpu.VMEM((H, K, W), dtype),             # im2col patches
            ],
        ),
        compiler_params=pltpu.CompilerParams(
            dimension_semantics=("parallel", "parallel"),
            vmem_limit_bytes=64 * 1024 * 1024,
        ),
    )(x_hcw, w, p)

    # Free (bitcast) reshape: (N, out_ch, H, 2, 2W) -> (N, out_ch, 2H, 2W).
    # TODO(synk): for large images add H-strip tiling with a 2-row halo
    # (strip sized per-generation VMEM) instead of full-image blocks.
    return out5.reshape(N, out_ch, 2 * H, 2 * W)


if __name__ == "__main__":
    key = jax.random.PRNGKey(0)
    kx, kw = jax.random.split(key)

    N, in_ch, out_ch, H, W = 2, 4, 4, 16, 16

    x = jax.random.normal(kx, (N, in_ch, H, W), dtype=jnp.float32)
    weight = jax.random.normal(kw, (out_ch * 4, in_ch, 3, 3),
                               dtype=jnp.float32) * 0.1

    out = upsample_forward(x, weight, out_ch)
    out = jax.block_until_ready(out)

    # Reference: XLA conv + manual pixel shuffle.
    ref_conv = jax.lax.conv_general_dilated(
        x, weight, window_strides=(1, 1), padding=((1, 1), (1, 1)),
        dimension_numbers=("NCHW", "OIHW", "NCHW"))
    r = ref_conv.reshape(N, out_ch, 2, 2, H, W)
    ref = jnp.transpose(r, (0, 1, 4, 2, 5, 3)).reshape(N, out_ch, 2 * H, 2 * W)

    assert out.shape == (N, out_ch, 2 * H, 2 * W)
    assert jnp.allclose(out, ref, atol=1e-4, rtol=1e-4)
    print("KERNEL_OK")
</pallas_src>

<mosaic_0001>
module attributes {stable_mosaic.version = 11 : i64} {
  func.func @_upsample_kernel(%arg0: i32, %arg1: i32, %arg2: memref<1x16x4x16xf32, #tpu.memory_space<vmem>>, %arg3: memref<1x4x36xf32, #tpu.memory_space<vmem>>, %arg4: memref<2x16x32xf32, #tpu.memory_space<vmem>>, %arg5: memref<1x1x16x2x32xf32, #tpu.memory_space<vmem>>, %arg6: memref<18x4x18xf32, #tpu.memory_space<vmem>>, %arg7: memref<16x36x16xf32, #tpu.memory_space<vmem>>) attributes {dimension_semantics = [#tpu.dimension_semantics<parallel>, #tpu.dimension_semantics<parallel>], iteration_bounds = array<i64: 2, 4>, scalar_prefetch = 0 : i64, scratch_operands = 2 : i64, tpu.core_type = #tpu.core_type<tc>, window_params = [{transform_indices = @transform_0, window_bounds = array<i64: 1, 16, 4, 16>}, {transform_indices = @transform_1, window_bounds = array<i64: 1, 4, 36>}, {pipeline_mode = #tpu.pipeline_mode<synchronous>, transform_indices = @transform_2, window_bounds = array<i64: 2, 16, 32>}, {transform_indices = @transform_3, window_bounds = array<i64: 1, 1, 16, 2, 32>}]} {
    %cst = arith.constant 0.000000e+00 : f32
    %0 = vector.broadcast %cst : f32 to vector<18x4x18xf32>
    %c0 = arith.constant 0 : index
    %c0_0 = arith.constant 0 : index
    %c0_1 = arith.constant 0 : index
    %1 = vector.load %arg6[%c0, %c0_0, %c0_1] : memref<18x4x18xf32, #tpu.memory_space<vmem>>, vector<18x4x18xf32>
    tpu.vector_store %arg6[%c0, %c0_0, %c0_1], %0 {strides = array<i32>} : memref<18x4x18xf32, #tpu.memory_space<vmem>>, vector<18x4x18xf32>,
    %c0_2 = arith.constant 0 : index
    %c0_3 = arith.constant 0 : index
    %c0_4 = arith.constant 0 : index
    %c0_5 = arith.constant 0 : index
    %2 = vector.load %arg2[%c0_2, %c0_3, %c0_4, %c0_5] : memref<1x16x4x16xf32, #tpu.memory_space<vmem>>, vector<1x16x4x16xf32>
    %3 = vector.shape_cast %2 : vector<1x16x4x16xf32> to vector<16x4x16xf32>
    %c1 = arith.constant 1 : index
    %c0_6 = arith.constant 0 : index
    %c1_7 = arith.constant 1 : index
    %4 = vector.load %arg6[%c1, %c0_6, %c1_7] : memref<18x4x18xf32, #tpu.memory_space<vmem>>, vector<16x4x16xf32>
    tpu.vector_store %arg6[%c1, %c0_6, %c1_7], %3 {strides = array<i32>} : memref<18x4x18xf32, #tpu.memory_space<vmem>>, vector<16x4x16xf32>,
    %c0_8 = arith.constant 0 : index
    %c0_9 = arith.constant 0 : index
    %c0_10 = arith.constant 0 : index
    %5 = vector.load %arg6[%c0_8, %c0_9, %c0_10] : memref<18x4x18xf32, #tpu.memory_space<vmem>>, vector<16x4x16xf32>
    %c0_11 = arith.constant 0 : index
    %c0_12 = arith.constant 0 : index
    %c0_13 = arith.constant 0 : index
    %6 = vector.load %arg7[%c0_11, %c0_12, %c0_13] : memref<16x36x16xf32, #tpu.memory_space<vmem>>, vector<16x4x16xf32>
    tpu.vector_store %arg7[%c0_11, %c0_12, %c0_13], %5 {strides = array<i32>} : memref<16x36x16xf32, #tpu.memory_space<vmem>>, vector<16x4x16xf32>,
    %c0_14 = arith.constant 0 : index
    %c0_15 = arith.constant 0 : index
    %c1_16 = arith.constant 1 : index
    %7 = vector.load %arg6[%c0_14, %c0_15, %c1_16] : memref<18x4x18xf32, #tpu.memory_space<vmem>>, vector<16x4x16xf32>
    %c0_17 = arith.constant 0 : index
    %c4 = arith.constant 4 : index
    %c0_18 = arith.constant 0 : index
    %8 = vector.load %arg7[%c0_17, %c4, %c0_18] : memref<16x36x16xf32, #tpu.memory_space<vmem>>, vector<16x4x16xf32>
    tpu.vector_store %arg7[%c0_17, %c4, %c0_18], %7 {strides = array<i32>} : memref<16x36x16xf32, #tpu.memory_space<vmem>>, vector<16x4x16xf32>,
    %c0_19 = arith.constant 0 : index
    %c0_20 = arith.constant 0 : index
    %c2 = arith.constant 2 : index
    %9 = vector.load %arg6[%c0_19, %c0_20, %c2] : memref<18x4x18xf32, #tpu.memory_space<vmem>>, vector<16x4x16xf32>
    %c0_21 = arith.constant 0 : index
    %c8 = arith.constant 8 : index
    %c0_22 = arith.constant 0 : index
    %10 = vector.load %arg7[%c0_21, %c8, %c0_22] : memref<16x36x16xf32, #tpu.memory_space<vmem>>, vector<16x4x16xf32>
    tpu.vector_store %arg7[%c0_21, %c8, %c0_22], %9 {strides = array<i32>} : memref<16x36x16xf32, #tpu.memory_space<vmem>>, vector<16x4x16xf32>,
    %c1_23 = arith.constant 1 : index
    %c0_24 = arith.constant 0 : index
    %c0_25 = arith.constant 0 : index
    %11 = vector.load %arg6[%c1_23, %c0_24, %c0_25] : memref<18x4x18xf32, #tpu.memory_space<vmem>>, vector<16x4x16xf32>
    %c0_26 = arith.constant 0 : index
    %c12 = arith.constant 12 : index
    %c0_27 = arith.constant 0 : index
    %12 = vector.load %arg7[%c0_26, %c12, %c0_27] : memref<16x36x16xf32, #tpu.memory_space<vmem>>, vector<16x4x16xf32>
    tpu.vector_store %arg7[%c0_26, %c12, %c0_27], %11 {strides = array<i32>} : memref<16x36x16xf32, #tpu.memory_space<vmem>>, vector<16x4x16xf32>,
    %c1_28 = arith.constant 1 : index
    %c0_29 = arith.constant 0 : index
    %c1_30 = arith.constant 1 : index
    %13 = vector.load %arg6[%c1_28, %c0_29, %c1_30] : memref<18x4x18xf32, #tpu.memory_space<vmem>>, vector<16x4x16xf32>
    %c0_31 = arith.constant 0 : index
    %c16 = arith.constant 16 : index
    %c0_32 = arith.constant 0 : index
    %14 = vector.load %arg7[%c0_31, %c16, %c0_32] : memref<16x36x16xf32, #tpu.memory_space<vmem>>, vector<16x4x16xf32>
    tpu.vector_store %arg7[%c0_31, %c16, %c0_32], %13 {strides = array<i32>} : memref<16x36x16xf32, #tpu.memory_space<vmem>>, vector<16x4x16xf32>,
    %c1_33 = arith.constant 1 : index
    %c0_34 = arith.constant 0 : index
    %c2_35 = arith.constant 2 : index
    %15 = vector.load %arg6[%c1_33, %c0_34, %c2_35] : memref<18x4x18xf32, #tpu.memory_space<vmem>>, vector<16x4x16xf32>
    %c0_36 = arith.constant 0 : index
    %c20 = arith.constant 20 : index
    %c0_37 = arith.constant 0 : index
    %16 = vector.load %arg7[%c0_36, %c20, %c0_37] : memref<16x36x16xf32, #tpu.memory_space<vmem>>, vector<16x4x16xf32>
    tpu.vector_store %arg7[%c0_36, %c20, %c0_37], %15 {strides = array<i32>} : memref<16x36x16xf32, #tpu.memory_space<vmem>>, vector<16x4x16xf32>,
    %c2_38 = arith.constant 2 : index
    %c0_39 = arith.constant 0 : index
    %c0_40 = arith.constant 0 : index
    %17 = vector.load %arg6[%c2_38, %c0_39, %c0_40] : memref<18x4x18xf32, #tpu.memory_space<vmem>>, vector<16x4x16xf32>
    %c0_41 = arith.constant 0 : index
    %c24 = arith.constant 24 : index
    %c0_42 = arith.constant 0 : index
    %18 = vector.load %arg7[%c0_41, %c24, %c0_42] : memref<16x36x16xf32, #tpu.memory_space<vmem>>, vector<16x4x16xf32>
    tpu.vector_store %arg7[%c0_41, %c24, %c0_42], %17 {strides = array<i32>} : memref<16x36x16xf32, #tpu.memory_space<vmem>>, vector<16x4x16xf32>,
    %c2_43 = arith.constant 2 : index
    %c0_44 = arith.constant 0 : index
    %c1_45 = arith.constant 1 : index
    %19 = vector.load %arg6[%c2_43, %c0_44, %c1_45] : memref<18x4x18xf32, #tpu.memory_space<vmem>>, vector<16x4x16xf32>
    %c0_46 = arith.constant 0 : index
    %c28 = arith.constant 28 : index
    %c0_47 = arith.constant 0 : index
    %20 = vector.load %arg7[%c0_46, %c28, %c0_47] : memref<16x36x16xf32, #tpu.memory_space<vmem>>, vector<16x4x16xf32>
    tpu.vector_store %arg7[%c0_46, %c28, %c0_47], %19 {strides = array<i32>} : memref<16x36x16xf32, #tpu.memory_space<vmem>>, vector<16x4x16xf32>,
    %c2_48 = arith.constant 2 : index
    %c0_49 = arith.constant 0 : index
    %c2_50 = arith.constant 2 : index
    %21 = vector.load %arg6[%c2_48, %c0_49, %c2_50] : memref<18x4x18xf32, #tpu.memory_space<vmem>>, vector<16x4x16xf32>
    %c0_51 = arith.constant 0 : index
    %c32 = arith.constant 32 : index
    %c0_52 = arith.constant 0 : index
    %22 = vector.load %arg7[%c0_51, %c32, %c0_52] : memref<16x36x16xf32, #tpu.memory_space<vmem>>, vector<16x4x16xf32>
    tpu.vector_store %arg7[%c0_51, %c32, %c0_52], %21 {strides = array<i32>} : memref<16x36x16xf32, #tpu.memory_space<vmem>>, vector<16x4x16xf32>,
    %c0_53 = arith.constant 0 : index
    %c0_54 = arith.constant 0 : index
    %c0_55 = arith.constant 0 : index
    %23 = vector.load %arg3[%c0_53, %c0_54, %c0_55] : memref<1x4x36xf32, #tpu.memory_space<vmem>>, vector<1x4x36xf32>
    %24 = vector.shape_cast %23 : vector<1x4x36xf32> to vector<4x36xf32>
    %25 = vector.shape_cast %24 : vector<4x36xf32> to vector<1x4x36xf32>
    %26 = vector.broadcast %25 : vector<1x4x36xf32> to vector<16x4x36xf32>
    %c0_56 = arith.constant 0 : index
    %c0_57 = arith.constant 0 : index
    %c0_58 = arith.constant 0 : index
    %27 = vector.load %arg7[%c0_56, %c0_57, %c0_58] : memref<16x36x16xf32, #tpu.memory_space<vmem>>, vector<16x36x16xf32>
    "tpu.trace_start"() <{level = 10 : i32, message = "hok,hkw->how"}> : () -> ()
    %cst_59 = arith.constant dense<0.000000e+00> : vector<16x4x16xf32>
    %28 = tpu.matmul %26, %27, %cst_59 {dimension_numbers = #tpu.dot_dimension_numbers<[2], [1], [1], [2], [0, 0, 0, 1, 1, 2], [0], [0]>} : vector<16x4x36xf32>, vector<16x36x16xf32>, vector<16x4x16xf32> -> vector<16x4x16xf32>
    "tpu.trace_stop"() : () -> ()
    %29 = vector.extract_strided_slice %28 {offsets = [0, 0, 0], sizes = [16, 2, 16], strides = [1, 1, 1]} : vector<16x4x16xf32> to vector<16x2x16xf32>
    %c0_60 = arith.constant 0 : index
    %c0_61 = arith.constant 0 : index
    %c0_62 = arith.constant 0 : index
    %30 = vector.load %arg4[%c0_60, %c0_61, %c0_62] : memref<2x16x32xf32, #tpu.memory_space<vmem>>, vector<1x16x32xf32>
    %31 = vector.shape_cast %30 : vector<1x16x32xf32> to vector<16x32xf32>
    "tpu.trace_start"() <{level = 10 : i32, message = "hiw,wx->hix"}> : () -> ()
    %cst_63 = arith.constant dense<0.000000e+00> : vector<16x2x32xf32>
    %32 = tpu.matmul %29, %31, %cst_63 {dimension_numbers = #tpu.dot_dimension_numbers<[2], [0], [0, 1], [1], [0, 0, 0, 1, 1, 1], [], []>} : vector<16x2x16xf32>, vector<16x32xf32>, vector<16x2x32xf32> -> vector<16x2x32xf32>
    "tpu.trace_stop"() : () -> ()
    %33 = vector.extract_strided_slice %28 {offsets = [0, 2, 0], sizes = [16, 2, 16], strides = [1, 1, 1]} : vector<16x4x16xf32> to vector<16x2x16xf32>
    %c1_64 = arith.constant 1 : index
    %c0_65 = arith.constant 0 : index
    %c0_66 = arith.constant 0 : index
    %34 = vector.load %arg4[%c1_64, %c0_65, %c0_66] : memref<2x16x32xf32, #tpu.memory_space<vmem>>, vector<1x16x32xf32>
    %35 = vector.shape_cast %34 : vector<1x16x32xf32> to vector<16x32xf32>
    "tpu.trace_start"() <{level = 10 : i32, message = "hiw,wx->hix"}> : () -> ()
    %cst_67 = arith.constant dense<0.000000e+00> : vector<16x2x32xf32>
    %36 = tpu.matmul %33, %35, %cst_67 {dimension_numbers = #tpu.dot_dimension_numbers<[2], [0], [0, 1], [1], [0, 0, 0, 1, 1, 1], [], []>} : vector<16x2x16xf32>, vector<16x32xf32>, vector<16x2x32xf32> -> vector<16x2x32xf32>
    "tpu.trace_stop"() : () -> ()
    %37 = arith.addf %32, %36 : vector<16x2x32xf32>
    %c0_68 = arith.constant 0 : index
    %c0_69 = arith.constant 0 : index
    %c0_70 = arith.constant 0 : index
    %c0_71 = arith.constant 0 : index
    %c0_72 = arith.constant 0 : index
    %38 = vector.load %arg5[%c0_68, %c0_69, %c0_70, %c0_71, %c0_72] : memref<1x1x16x2x32xf32, #tpu.memory_space<vmem>>, vector<1x1x16x2x32xf32>
    %39 = vector.shape_cast %38 : vector<1x1x16x2x32xf32> to vector<16x2x32xf32>
    %40 = vector.shape_cast %37 : vector<16x2x32xf32> to vector<1x1x16x2x32xf32>
    tpu.vector_store %arg5[%c0_68, %c0_69, %c0_70, %c0_71, %c0_72], %40 {strides = array<i32>} : memref<1x1x16x2x32xf32, #tpu.memory_space<vmem>>, vector<1x1x16x2x32xf32>,
    return
  }
  func.func @transform_0(%arg0: i32, %arg1: i32) -> (i32, i32, i32, i32) {
    %c0_i32 = arith.constant 0 : i32
    %c0_i32_0 = arith.constant 0 : i32
    %c0_i32_1 = arith.constant 0 : i32
    %c0_i32_2 = arith.constant 0 : i32
    return %arg0, %c0_i32, %c0_i32_0, %c0_i32_1 : i32, i32, i32, i32
  }
  func.func @transform_1(%arg0: i32, %arg1: i32) -> (i32, i32, i32) {
    %c0_i32 = arith.constant 0 : i32
    %c0_i32_0 = arith.constant 0 : i32
    %c0_i32_1 = arith.constant 0 : i32
    return %arg1, %c0_i32, %c0_i32_0 : i32, i32, i32
  }
  func.func @transform_2(%arg0: i32, %arg1: i32) -> (i32, i32, i32) {
    %c0_i32 = arith.constant 0 : i32
    %c0_i32_0 = arith.constant 0 : i32
    %c0_i32_1 = arith.constant 0 : i32
    %c0_i32_2 = arith.constant 0 : i32
    return %c0_i32, %c0_i32_0, %c0_i32_1 : i32, i32, i32
  }
  func.func @transform_3(%arg0: i32, %arg1: i32) -> (i32, i32, i32, i32, i32) {
    %c0_i32 = arith.constant 0 : i32
    %c0_i32_0 = arith.constant 0 : i32
    %c0_i32_1 = arith.constant 0 : i32
    %c0_i32_2 = arith.constant 0 : i32
    return %arg0, %arg1, %c0_i32, %c0_i32_0, %c0_i32_1 : i32, i32, i32, i32, i32
  }
}

</mosaic_0001>

<llo_original>
// kernel: tpu_custom_call.1
$region0: #{tpu_custom_call.1}
  #allocation0 [shape = 'u32[]', space=smem, size = 0x4, offset = 0x4, fixed_abs, tag = 'smem constant byte address 0x4 - core index']
  #allocation1 [shape = 'u32[144,128]{1,0:T(1,128)}', space=vmem, size = 0x12000, scoped, tag = 'internal scratch']
  #allocation2 [shape = 'f32[18,4,18]{2,1,0:T(4,128)}', space=vmem, size = 0x9000, scoped, tag = 'scratch operand']
  #allocation3 [shape = 'f32[16,36,16]{2,1,0:T(8,128)}', space=vmem, size = 0x50000, scoped, tag = 'scratch operand']
  %s0 = inlined_call_operand.hbm [shape: f32[2,16,4,16], index: 0, kind: input, shape index: {}]
  %s1 = inlined_call_operand.hbm [shape: f32[4,4,36], index: 1, kind: input, shape index: {}]
  %s2 = inlined_call_operand.hbm [shape: f32[2,16,32], index: 2, kind: input, shape index: {}]
  %s3 = inlined_call_operand.hbm [shape: f32[2,4,16,2,32], index: 3, kind: output, shape index: {}]
  %s4 = sld [smem:[#allocation0]]
  $region57: #{tpu_custom_call.1} parent=0
    _
  %s6 = ssub.s32 1, %s4
  %s7 = scalar_select 0, %s6, %s4
  $region1: #{tpu_custom_call.1} parent=0
    #allocation4 [shape = 'u8[65536]{0}', space=vmem, size = 0x10000, scoped, tag = 'input window, operand 0']
    #allocation5 [shape = 's32[2]{0}', space=sflag, size = 0x8, scoped, tag = 'scoped memory for tpu_custom_call.1']
    #allocation6 [shape = 's32[2]{0}', space=sflag, size = 0x8, scoped, tag = 'scoped memory for tpu_custom_call.1']
    #allocation7 [shape = 'u8[4096]{0}', space=vmem, size = 0x1000, scoped, tag = 'input window, operand 1']
    #allocation8 [shape = 's32[2]{0}', space=sflag, size = 0x8, scoped, tag = 'scoped memory for tpu_custom_call.1']
    #allocation9 [shape = 'u8[16384]{0}', space=vmem, size = 0x4000, scoped, tag = 'input window, operand 2, single buffered']
    #allocation10 [shape = 'u8[32768]{0}', space=vmem, size = 0x8000, scoped, tag = 'output window, operand 0']
    %8 = vsyncpa [#allocation5], 0
    %s9 = scalar_lea.sflag [#allocation5], 1
    %10 = vsyncpa %s9, 0
    %11 = vsyncpa [#allocation8], 0
    %s12 = scalar_lea.sflag [#allocation8], 1
    %13 = vsyncpa %s12, 0
    %14 = vsyncpa [#allocation6], 0
    %s15 = scalar_lea.sflag [#allocation6], 1
    %16 = vsyncpa %s15, 0
    loop: start=0, step=1, limit=10
    $region2: #{tpu_custom_call.1} parent=1 // loop_pre_header
      _
    $region3: #{tpu_custom_call.1} parent=1 // loop_header
      %s18 = sphi 0, %s22
      %p19 = scmp.ge.s32.totalorder %s18, 10
      %s25 = sphi 0, %s37
      %s26 = sphi 0, %s33
      %s27 = sphi 0, %s25
      %s28 = sphi 0, %s26
      %s29 = sphi 0, %s27
      %s30 = sphi 0, %s28
      %s40 = sphi 0, %s42
      %s43 = sphi 0, %s40
      %s44 = sphi 0, %s43
      %s60 = sphi 0, %s44
      %s66 = sphi 0, %s68
      %s69 = sphi 0, %s66
      %s70 = sphi 0, %s69
      %s86 = sphi 0, %s70
      %s90 = sphi 0, %s90
      %s92 = sphi 0, %s90
      %s93 = sphi 0, %s92
      %s107 = sphi 0, %s93
      %s115 = sphi 0, %s117
      %s118 = sphi 0, %s115
      %s119 = sphi 0, %s118
      %s135 = sphi 0, %s119
    $region4: #{tpu_custom_call.1} parent=1 // loop_header_branch
      %21 = sbr.rel (%p19) target = $region8
    $region5: #{tpu_custom_call.1} parent=1 // loop_body
      %s23 = ssub.s32 %s18, 1
      %s24 = ssub.s32 %s18, 2
      %s31 = sadd.s32 1, %s26
      %p32 = scmp.ge.s32.totalorder %s31, 4
      %s33 = scalar_select %p32, 0, %s31
      %s34 = sadd.s32 1, %s25
      %s35 = scalar_select %p32, %s34, %s25
      %p36 = scmp.ge.s32.totalorder %s35, 2
      %s37 = scalar_select %p36, 0, %s35
      %s38 = ssub.s32 %s25, %s37
      %p39 = scmp.eq.s32.totalorder %s38, 0
      %s41 = sadd.s32 %s40, 1
      %s42 = scalar_select %p39, %s40, %s41
      %p45 = pneg %p39
      %p46 = scmp.eq.s32.totalorder %s18, 7
      %p47 = por %p45, %p46
      %p48 = scmp.ne.s32.totalorder %s40, %s43
      %p49 = scmp.eq.s32.totalorder %s18, 0
      %p50 = por %p48, %p49
      %p51 = scmp.ne.s32.totalorder %s40, %s43
      %p52 = scmp.eq.s32.totalorder %s23, 7
      %p53 = por %p51, %p52
      %p54 = scmp.ne.s32.totalorder %s43, %s44
      %p55 = scmp.eq.s32.totalorder %s23, 0
      %p56 = por %p54, %p55
      %p57 = scmp.ne.s32.totalorder %s43, %s44
      %p58 = scmp.eq.s32.totalorder %s24, 7
      %p59 = por %p57, %p58
      %p61 = scmp.ne.s32.totalorder %s44, %s60
      %p62 = scmp.eq.s32.totalorder %s24, 0
      %p63 = por %p61, %p62
      %s64 = ssub.s32 %s26, %s33
      %p65 = scmp.eq.s32.totalorder %s64, 0
      %s67 = sadd.s32 %s66, 1
      %s68 = scalar_select %p65, %s66, %s67
      %p71 = pneg %p65
      %p72 = scmp.eq.s32.totalorder %s18, 7
      %p73 = por %p71, %p72
      %p74 = scmp.ne.s32.totalorder %s66, %s69
      %p75 = scmp.eq.s32.totalorder %s18, 0
      %p76 = por %p74, %p75
      %p77 = scmp.ne.s32.totalorder %s66, %s69
      %p78 = scmp.eq.s32.totalorder %s23, 7
      %p79 = por %p77, %p78
      %p80 = scmp.ne.s32.totalorder %s69, %s70
      %p81 = scmp.eq.s32.totalorder %s23, 0
      %p82 = por %p80, %p81
      %p83 = scmp.ne.s32.totalorder %s69, %s70
      %p84 = scmp.eq.s32.totalorder %s24, 7
      %p85 = por %p83, %p84
      %p87 = scmp.ne.s32.totalorder %s70, %s86
      %p88 = scmp.eq.s32.totalorder %s24, 0
      %p89 = por %p87, %p88
      %s91 = sadd.s32 %s90, 1
      %p94 = scmp.eq.s32.totalorder %s18, 7
      %p95 = scmp.ne.s32.totalorder %s90, %s92
      %p96 = scmp.eq.s32.totalorder %s18, 0
      %p97 = por %p95, %p96
      %p98 = scmp.ne.s32.totalorder %s90, %s92
      %p99 = scmp.eq.s32.totalorder %s23, 7
      %p100 = por %p98, %p99
      %p101 = scmp.ne.s32.totalorder %s92, %s93
      %p102 = scmp.eq.s32.totalorder %s23, 0
      %p103 = por %p101, %p102
      %p104 = scmp.ne.s32.totalorder %s92, %s93
      %p105 = scmp.eq.s32.totalorder %s24, 7
      %p106 = por %p104, %p105
      %p108 = scmp.ne.s32.totalorder %s93, %s107
      %p109 = scmp.eq.s32.totalorder %s24, 0
      %p110 = por %p108, %p109
      %s111 = ssub.s32 %s25, %s37
      %s112 = ssub.s32 %s26, %s33
      %s113 = sor.u32 %s111, %s112
      %p114 = scmp.eq.s32.totalorder %s113, 0
      %s116 = sadd.s32 %s115, 1
      %s117 = scalar_select %p114, %s115, %s116
      %p120 = pneg %p114
      %p121 = scmp.eq.s32.totalorder %s18, 7
      %p122 = por %p120, %p121
      %p123 = scmp.ne.s32.totalorder %s115, %s118
      %p124 = scmp.eq.s32.totalorder %s18, 0
      %p125 = por %p123, %p124
      %p126 = scmp.ne.s32.totalorder %s115, %s118
      %p127 = scmp.eq.s32.totalorder %s23, 7
      %p128 = por %p126, %p127
      %p129 = scmp.ne.s32.totalorder %s118, %s119
      %p130 = scmp.eq.s32.totalorder %s23, 0
      %p131 = por %p129, %p130
      %p132 = scmp.ne.s32.totalorder %s118, %s119
      %p133 = scmp.eq.s32.totalorder %s24, 7
      %p134 = por %p132, %p133
      %p136 = scmp.ne.s32.totalorder %s119, %s135
      %p137 = scmp.eq.s32.totalorder %s24, 0
      %p138 = por %p136, %p137
      %p139 = scmp.le.s32.totalorder 1, %s18
      %p140 = scmp.lt.s32.totalorder %s18, 9
      %p141 = pnand %p139, %p140
      %p142 = pneg %p141
      // Predicated region
      $region9: #{tpu_custom_call.1} parent=5 // pred_check
        _
      $region10: #{tpu_custom_call.1} parent=5 // pred_check_branch
        %144 = sbr.rel (%p141) target = $region12
      $region11: #{tpu_custom_call.1} parent=5 // pred_region
        %s145 = ssub.s32 %s18, 1
        // Predicated region
        $region13: #{tpu_custom_call.1} parent=11 // pred_check
          %p146 = pneg %p103
        $region14: #{tpu_custom_call.1} parent=11 // pred_check_branch
          %148 = sbr.rel (%p146) target = $region16
        $region15: #{tpu_custom_call.1} parent=11 // pred_region
          %s150 = ssub.s32 512, 512
          %151 = vsyncadd [#allocation8], %s150
          %s152 = sshll.u32 [#allocation9], 4
          %s153 = int_to_ptr.vmem [resolvable:$true] %s152
          %158 = dma.hbm_to_vmem [thread:$0]  %s2, 512, %s153, [#allocation8], 128, 128, 8
        $region16: #{tpu_custom_call.1} parent=11 // pred_fallthru
          _
      $region12: #{tpu_custom_call.1} parent=5 // pred_fallthru
        _
      %p159 = scmp.lt.s32.totalorder %s18, 8
      // Predicated region
      $region17: #{tpu_custom_call.1} parent=5 // pred_check
        %p160 = pneg %p159
      $region18: #{tpu_custom_call.1} parent=5 // pred_check_branch
        %162 = sbr.rel (%p160) target = $region20
      $region19: #{tpu_custom_call.1} parent=5 // pred_region
        // Predicated region
        $region21: #{tpu_custom_call.1} parent=19 // pred_check
          %p163 = pneg %p50
        $region22: #{tpu_custom_call.1} parent=19 // pred_check_branch
          %165 = sbr.rel (%p163) target = $region24
        $region23: #{tpu_custom_call.1} parent=19 // pred_region
          %s166 = sand.u32 %s40, 1
          %s167 = scalar_lea.sflag [#allocation5], %s166
          %s168 = sand.u32 %s40, 1
          %s169 = smul.addr %s168, 64
          %s170 = scalar_lea.vmem [#allocation4], %s169
          %s172 = ssub.s32 1024, 1024
          %173 = vsyncadd %s167, %s172
          %s174 = smul.addr %s25, 16
          %s175 = smul.addr %s174, 64
          %s176 = scalar_lea.hbm %s0, %s175
          %s177 = sshll.u32 %s170, 4
          %s178 = int_to_ptr.vmem [resolvable:$true] %s177
          %183 = dma.hbm_to_vmem [thread:$0]  %s176, 1024, %s178, %s167, 64, 64, 4
        $region24: #{tpu_custom_call.1} parent=19 // pred_fallthru
          _
        // Predicated region
        $region25: #{tpu_custom_call.1} parent=19 // pred_check
          %p184 = pneg %p76
        $region26: #{tpu_custom_call.1} parent=19 // pred_check_branch
          %186 = sbr.rel (%p184) target = $region28
        $region27: #{tpu_custom_call.1} parent=19 // pred_region
          %s187 = sand.u32 %s18, 1
          %s188 = scalar_lea.sflag [#allocation8], %s187
          %s189 = sand.u32 %s66, 1
          %s190 = smul.addr %s189, 4
          %s191 = scalar_lea.vmem [#allocation7], %s190
          %s193 = ssub.s32 64, 64
          %194 = vsyncadd %s188, %s193
          %s195 = smul.addr %s26, 64
          %s196 = scalar_lea.hbm %s1, %s195
          %s198 = sshll.u32 %s191, 4
          %s199 = int_to_ptr.vmem [resolvable:$true] %s198
          %201 = dma.hbm_to_vmem [thread:$0]  %s196, 64, %s199, %s188
        $region28: #{tpu_custom_call.1} parent=19 // pred_fallthru
          _
      $region20: #{tpu_custom_call.1} parent=5 // pred_fallthru
        _
      %p202 = scmp.le.s32.totalorder 1, %s18
      %p203 = scmp.lt.s32.totalorder %s18, 9
      %p204 = pnand %p202, %p203
      %p205 = pneg %p204
      // Predicated region
      $region29: #{tpu_custom_call.1} parent=5 // pred_check
        _
      $region30: #{tpu_custom_call.1} parent=5 // pred_check_branch
        %207 = sbr.rel (%p204) target = $region32
      $region31: #{tpu_custom_call.1} parent=5 // pred_region
        %s208 = ssub.s32 %s18, 1
        %s209 = sand.u32 %s43, 1
        %s210 = scalar_lea.sflag [#allocation5], %s209
        %s211 = sand.u32 %s43, 1
        %s212 = smul.addr %s211, 64
        %s213 = scalar_lea.vmem [#allocation4], %s212
        // Predicated region
        $region33: #{tpu_custom_call.1} parent=31 // pred_check
          %p214 = pneg %p56
        $region34: #{tpu_custom_call.1} parent=31 // pred_check_branch
          %216 = sbr.rel (%p214) target = $region36
        $region35: #{tpu_custom_call.1} parent=31 // pred_region
          %217 = dma.done %s210, 1024
        $region36: #{tpu_custom_call.1} parent=31 // pred_fallthru
          _
        %s218 = sand.u32 %s23, 1
        %s219 = scalar_lea.sflag [#allocation8], %s218
        %s220 = sand.u32 %s69, 1
        %s221 = smul.addr %s220, 4
        %s222 = scalar_lea.vmem [#allocation7], %s221
        // Predicated region
        $region37: #{tpu_custom_call.1} parent=31 // pred_check
          %p223 = pneg %p82
        $region38: #{tpu_custom_call.1} parent=31 // pred_check_branch
          %225 = sbr.rel (%p223) target = $region40
        $region39: #{tpu_custom_call.1} parent=31 // pred_region
          %226 = dma.done %s219, 64
        $region40: #{tpu_custom_call.1} parent=31 // pred_fallthru
          _
        // Predicated region
        $region41: #{tpu_custom_call.1} parent=31 // pred_check
          %p227 = pneg %p103
        $region42: #{tpu_custom_call.1} parent=31 // pred_check_branch
          %229 = sbr.rel (%p227) target = $region44
        $region43: #{tpu_custom_call.1} parent=31 // pred_region
          %230 = dma.done [#allocation8], 512
        $region44: #{tpu_custom_call.1} parent=31 // pred_fallthru
          _
        %s231 = sand.u32 %s43, 1
        %s232 = scalar_lea.sflag [#allocation5], %s231
        %s233 = sand.u32 %s43, 1
        %s234 = smul.addr %s233, 64
        %s235 = scalar_lea.vmem [#allocation4], %s234
        %p236 = pneg %p56
        %p237 = pneg %p53
        %s238 = sand.u32 %s23, 1
        %s239 = scalar_lea.sflag [#allocation8], %s238
        %s240 = sand.u32 %s69, 1
        %s241 = smul.addr %s240, 4
        %s242 = scalar_lea.vmem [#allocation7], %s241
        %p243 = pneg %p82
        %p244 = pneg %p79
        %p245 = pneg %p103
        %p246 = pneg %p100
        %p247 = pneg %p131
        %p248 = pneg %p128
        %s249 = sand.u32 %s118, 1
        %s250 = scalar_lea.sflag [#allocation6], %s249
        %s251 = sand.u32 %s118, 1
        %s252 = smul.addr %s251, 32
        %s253 = scalar_lea.vmem [#allocation10], %s252
        %vm254 = vcmask 142336
        %255 = vst.msk [vmem:[#allocation2] sm:$0xf] %vm254, 0.0
        %256 = vst.msk [vmem:[#allocation2 + $0x4] sm:$0xf] %vm254, 0.0
        %257 = vst.msk [vmem:[#allocation2 + $0x8] sm:$0xf] %vm254, 0.0
        %258 = vst.msk [vmem:[#allocation2 + $0xc] sm:$0xf] %vm254, 0.0
        %259 = vst.msk [vmem:[#allocation2 + $0x10] sm:$0xf] %vm254, 0.0
        %260 = vst.msk [vmem:[#allocation2 + $0x14] sm:$0xf] %vm254, 0.0
        %261 = vst.msk [vmem:[#allocation2 + $0x18] sm:$0xf] %vm254, 0.0
        %262 = vst.msk [vmem:[#allocation2 + $0x1c] sm:$0xf] %vm254, 0.0
        %263 = vst.msk [vmem:[#allocation2 + $0x20] sm:$0xf] %vm254, 0.0
        %264 = vst.msk [vmem:[#allocation2 + $0x24] sm:$0xf] %vm254, 0.0
        %265 = vst.msk [vmem:[#allocation2 + $0x28] sm:$0xf] %vm254, 0.0
        %266 = vst.msk [vmem:[#allocation2 + $0x2c] sm:$0xf] %vm254, 0.0
        %267 = vst.msk [vmem:[#allocation2 + $0x30] sm:$0xf] %vm254, 0.0
        %268 = vst.msk [vmem:[#allocation2 + $0x34] sm:$0xf] %vm254, 0.0
        %269 = vst.msk [vmem:[#allocation2 + $0x38] sm:$0xf] %vm254, 0.0
        %270 = vst.msk [vmem:[#allocation2 + $0x3c] sm:$0xf] %vm254, 0.0
        %271 = vst.msk [vmem:[#allocation2 + $0x40] sm:$0xf] %vm254, 0.0
        %272 = vst.msk [vmem:[#allocation2 + $0x44] sm:$0xf] %vm254, 0.0
        %v273 = vld [vmem:[%s213] sm:$0xf]
        %v274 = vld [vmem:[%s213 + $0x4] sm:$0xf]
        %v275 = vld [vmem:[%s213 + $0x8] sm:$0xf]
        %v276 = vld [vmem:[%s213 + $0xc] sm:$0xf]
        %v277 = vld [vmem:[%s213 + $0x10] sm:$0xf]
        %v278 = vld [vmem:[%s213 + $0x14] sm:$0xf]
        %v279 = vld [vmem:[%s213 + $0x18] sm:$0xf]
        %v280 = vld [vmem:[%s213 + $0x1c] sm:$0xf]
        %v281 = vld [vmem:[%s213 + $0x20] sm:$0xf]
        %v282 = vld [vmem:[%s213 + $0x24] sm:$0xf]
        %v283 = vld [vmem:[%s213 + $0x28] sm:$0xf]
        %v284 = vld [vmem:[%s213 + $0x2c] sm:$0xf]
        %v285 = vld [vmem:[%s213 + $0x30] sm:$0xf]
        %v286 = vld [vmem:[%s213 + $0x34] sm:$0xf]
        %v287 = vld [vmem:[%s213 + $0x38] sm:$0xf]
        %v288 = vld [vmem:[%s213 + $0x3c] sm:$0xf]
        %305 = vrot.lane.b32.xlu0 %v273, 1
        %v306 = vpop.permute.xlu0 %305
        %307 = vrot.lane.b32.xlu0 %v274, 1
        %v308 = vpop.permute.xlu0 %307
        %309 = vrot.lane.b32.xlu0 %v275, 1
        %v310 = vpop.permute.xlu0 %309
        %311 = vrot.lane.b32.xlu0 %v276, 1
        %v312 = vpop.permute.xlu0 %311
        %313 = vrot.lane.b32.xlu0 %v277, 1
        %v314 = vpop.permute.xlu0 %313
        %315 = vrot.lane.b32.xlu0 %v278, 1
        %v316 = vpop.permute.xlu0 %315
        %317 = vrot.lane.b32.xlu0 %v279, 1
        %v318 = vpop.permute.xlu0 %317
        %319 = vrot.lane.b32.xlu0 %v280, 1
        %v320 = vpop.permute.xlu0 %319
        %321 = vrot.lane.b32.xlu0 %v281, 1
        %v322 = vpop.permute.xlu0 %321
        %323 = vrot.lane.b32.xlu0 %v282, 1
        %v324 = vpop.permute.xlu0 %323
        %325 = vrot.lane.b32.xlu0 %v283, 1
        %v326 = vpop.permute.xlu0 %325
        %327 = vrot.lane.b32.xlu0 %v284, 1
        %v328 = vpop.permute.xlu0 %327
        %329 = vrot.lane.b32.xlu0 %v285, 1
        %v330 = vpop.permute.xlu0 %329
        %331 = vrot.lane.b32.xlu0 %v286, 1
        %v332 = vpop.permute.xlu0 %331
        %333 = vrot.lane.b32.xlu0 %v287, 1
        %v334 = vpop.permute.xlu0 %333
        %335 = vrot.lane.b32.xlu0 %v288, 1
        %v336 = vpop.permute.xlu0 %335
        %s353 = scalar_lea.vmem [#allocation2], 4
        %vm354 = vcmask 134152
        %355 = vst.msk [vmem:[%s353] sm:$0xf] %vm354, %v306
        %356 = vst.msk [vmem:[%s353 + $0x4] sm:$0xf] %vm354, %v308
        %357 = vst.msk [vmem:[%s353 + $0x8] sm:$0xf] %vm354, %v310
        %358 = vst.msk [vmem:[%s353 + $0xc] sm:$0xf] %vm354, %v312
        %359 = vst.msk [vmem:[%s353 + $0x10] sm:$0xf] %vm354, %v314
        %360 = vst.msk [vmem:[%s353 + $0x14] sm:$0xf] %vm354, %v316
        %361 = vst.msk [vmem:[%s353 + $0x18] sm:$0xf] %vm354, %v318
        %362 = vst.msk [vmem:[%s353 + $0x1c] sm:$0xf] %vm354, %v320
        %363 = vst.msk [vmem:[%s353 + $0x20] sm:$0xf] %vm354, %v322
        %364 = vst.msk [vmem:[%s353 + $0x24] sm:$0xf] %vm354, %v324
        %365 = vst.msk [vmem:[%s353 + $0x28] sm:$0xf] %vm354, %v326
        %366 = vst.msk [vmem:[%s353 + $0x2c] sm:$0xf] %vm354, %v328
        %367 = vst.msk [vmem:[%s353 + $0x30] sm:$0xf] %vm354, %v330
        %368 = vst.msk [vmem:[%s353 + $0x34] sm:$0xf] %vm354, %v332
        %369 = vst.msk [vmem:[%s353 + $0x38] sm:$0xf] %vm354, %v334
        %370 = vst.msk [vmem:[%s353 + $0x3c] sm:$0xf] %vm354, %v336
        %v371 = vld [vmem:[#allocation2] sm:$0xf]
        %v372 = vld [vmem:[#allocation2 + $0x4] sm:$0xf]
        %v373 = vld [vmem:[#allocation2 + $0x8] sm:$0xf]
        %v374 = vld [vmem:[#allocation2 + $0xc] sm:$0xf]
        %v375 = vld [vmem:[#allocation2 + $0x10] sm:$0xf]
        %v376 = vld [vmem:[#allocation2 + $0x14] sm:$0xf]
        %v377 = vld [vmem:[#allocation2 + $0x18] sm:$0xf]
        %v378 = vld [vmem:[#allocation2 + $0x1c] sm:$0xf]
        %v379 = vld [vmem:[#allocation2 + $0x20] sm:$0xf]
        %v380 = vld [vmem:[#allocation2 + $0x24] sm:$0xf]
        %v381 = vld [vmem:[#allocation2 + $0x28] sm:$0xf]
        %v382 = vld [vmem:[#allocation2 + $0x2c] sm:$0xf]
        %v383 = vld [vmem:[#allocation2 + $0x30] sm:$0xf]
        %v384 = vld [vmem:[#allocation2 + $0x34] sm:$0xf]
        %v385 = vld [vmem:[#allocation2 + $0x38] sm:$0xf]
        %v386 = vld [vmem:[#allocation2 + $0x3c] sm:$0xf]
        %vm387 = vcmask 125952
        %388 = vst.msk [vmem:[#allocation3] sm:$0xf] %vm387, %v371
        %389 = vst.msk [vmem:[#allocation3 + $0x28] sm:$0xf] %vm387, %v372
        %390 = vst.msk [vmem:[#allocation3 + $0x50] sm:$0xf] %vm387, %v373
        %391 = vst.msk [vmem:[#allocation3 + $0x78] sm:$0xf] %vm387, %v374
        %392 = vst.msk [vmem:[#allocation3 + $0xa0] sm:$0xf] %vm387, %v375
        %393 = vst.msk [vmem:[#allocation3 + $0xc8] sm:$0xf] %vm387, %v376
        %394 = vst.msk [vmem:[#allocation3 + $0xf0] sm:$0xf] %vm387, %v377
        %395 = vst.msk [vmem:[#allocation3 + $0x118] sm:$0xf] %vm387, %v378
        %396 = vst.msk [vmem:[#allocation3 + $0x140] sm:$0xf] %vm387, %v379
        %397 = vst.msk [vmem:[#allocation3 + $0x168] sm:$0xf] %vm387, %v380
        %398 = vst.msk [vmem:[#allocation3 + $0x190] sm:$0xf] %vm387, %v381
        %399 = vst.msk [vmem:[#allocation3 + $0x1b8] sm:$0xf] %vm387, %v382
        %400 = vst.msk [vmem:[#allocation3 + $0x1e0] sm:$0xf] %vm387, %v383
        %401 = vst.msk [vmem:[#allocation3 + $0x208] sm:$0xf] %vm387, %v384
        %402 = vst.msk [vmem:[#allocation3 + $0x230] sm:$0xf] %vm387, %v385
        %403 = vst.msk [vmem:[#allocation3 + $0x258] sm:$0xf] %vm387, %v386
        %v404 = vld [vmem:[#allocation2] sm:$0xf]
        %v405 = vld [vmem:[#allocation2 + $0x4] sm:$0xf]
        %v406 = vld [vmem:[#allocation2 + $0x8] sm:$0xf]
        %v407 = vld [vmem:[#allocation2 + $0xc] sm:$0xf]
        %v408 = vld [vmem:[#allocation2 + $0x10] sm:$0xf]
        %v409 = vld [vmem:[#allocation2 + $0x14] sm:$0xf]
        %v410 = vld [vmem:[#allocation2 + $0x18] sm:$0xf]
        %v411 = vld [vmem:[#allocation2 + $0x1c] sm:$0xf]
        %v412 = vld [vmem:[#allocation2 + $0x20] sm:$0xf]
        %v413 = vld [vmem:[#allocation2 + $0x24] sm:$0xf]
        %v414 = vld [vmem:[#allocation2 + $0x28] sm:$0xf]
        %v415 = vld [vmem:[#allocation2 + $0x2c] sm:$0xf]
        %v416 = vld [vmem:[#allocation2 + $0x30] sm:$0xf]
        %v417 = vld [vmem:[#allocation2 + $0x34] sm:$0xf]
        %v418 = vld [vmem:[#allocation2 + $0x38] sm:$0xf]
        %v419 = vld [vmem:[#allocation2 + $0x3c] sm:$0xf]
        %436 = vrot.lane.b32.xlu0 %v404, 127
        %v437 = vpop.permute.xlu0 %436
        %438 = vrot.lane.b32.xlu0 %v405, 127
        %v439 = vpop.permute.xlu0 %438
        %440 = vrot.lane.b32.xlu0 %v406, 127
        %v441 = vpop.permute.xlu0 %440
        %442 = vrot.lane.b32.xlu0 %v407, 127
        %v443 = vpop.permute.xlu0 %442
        %444 = vrot.lane.b32.xlu0 %v408, 127
        %v445 = vpop.permute.xlu0 %444
        %446 = vrot.lane.b32.xlu0 %v409, 127
        %v447 = vpop.permute.xlu0 %446
        %448 = vrot.lane.b32.xlu0 %v410, 127
        %v449 = vpop.permute.xlu0 %448
        %450 = vrot.lane.b32.xlu0 %v411, 127
        %v451 = vpop.permute.xlu0 %450
        %452 = vrot.lane.b32.xlu0 %v412, 127
        %v453 = vpop.permute.xlu0 %452
        %454 = vrot.lane.b32.xlu0 %v413, 127
        %v455 = vpop.permute.xlu0 %454
        %456 = vrot.lane.b32.xlu0 %v414, 127
        %v457 = vpop.permute.xlu0 %456
        %458 = vrot.lane.b32.xlu0 %v415, 127
        %v459 = vpop.permute.xlu0 %458
        %460 = vrot.lane.b32.xlu0 %v416, 127
        %v461 = vpop.permute.xlu0 %460
        %462 = vrot.lane.b32.xlu0 %v417, 127
        %v463 = vpop.permute.xlu0 %462
        %464 = vrot.lane.b32.xlu0 %v418, 127
        %v465 = vpop.permute.xlu0 %464
        %466 = vrot.lane.b32.xlu0 %v419, 127
        %v467 = vpop.permute.xlu0 %466
        %484 = vst.msk [vmem:[#allocation3 + $0x4] sm:$0xf] %vm387, %v437
        %485 = vst.msk [vmem:[#allocation3 + $0x2c] sm:$0xf] %vm387, %v439
        %486 = vst.msk [vmem:[#allocation3 + $0x54] sm:$0xf] %vm387, %v441
        %487 = vst.msk [vmem:[#allocation3 + $0x7c] sm:$0xf] %vm387, %v443
        %488 = vst.msk [vmem:[#allocation3 + $0xa4] sm:$0xf] %vm387, %v445
        %489 = vst.msk [vmem:[#allocation3 + $0xcc] sm:$0xf] %vm387, %v447
        %490 = vst.msk [vmem:[#allocation3 + $0xf4] sm:$0xf] %vm387, %v449
        %491 = vst.msk [vmem:[#allocation3 + $0x11c] sm:$0xf] %vm387, %v451
        %492 = vst.msk [vmem:[#allocation3 + $0x144] sm:$0xf] %vm387, %v453
        %493 = vst.msk [vmem:[#allocation3 + $0x16c] sm:$0xf] %vm387, %v455
        %494 = vst.msk [vmem:[#allocation3 + $0x194] sm:$0xf] %vm387, %v457
        %495 = vst.msk [vmem:[#allocation3 + $0x1bc] sm:$0xf] %vm387, %v459
        %496 = vst.msk [vmem:[#allocation3 + $0x1e4] sm:$0xf] %vm387, %v461
        %497 = vst.msk [vmem:[#allocation3 + $0x20c] sm:$0xf] %vm387, %v463
        %498 = vst.msk [vmem:[#allocation3 + $0x234] sm:$0xf] %vm387, %v465
        %499 = vst.msk [vmem:[#allocation3 + $0x25c] sm:$0xf] %vm387, %v467
        %v500 = vld [vmem:[#allocation2] sm:$0xf]
        %v501 = vld [vmem:[#allocation2 + $0x4] sm:$0xf]
        %v502 = vld [vmem:[#allocation2 + $0x8] sm:$0xf]
        %v503 = vld [vmem:[#allocation2 + $0xc] sm:$0xf]
        %v504 = vld [vmem:[#allocation2 + $0x10] sm:$0xf]
        %v505 = vld [vmem:[#allocation2 + $0x14] sm:$0xf]
        %v506 = vld [vmem:[#allocation2 + $0x18] sm:$0xf]
        %v507 = vld [vmem:[#allocation2 + $0x1c] sm:$0xf]
        %v508 = vld [vmem:[#allocation2 + $0x20] sm:$0xf]
        %v509 = vld [vmem:[#allocation2 + $0x24] sm:$0xf]
        %v510 = vld [vmem:[#allocation2 + $0x28] sm:$0xf]
        %v511 = vld [vmem:[#allocation2 + $0x2c] sm:$0xf]
        %v512 = vld [vmem:[#allocation2 + $0x30] sm:$0xf]
        %v513 = vld [vmem:[#allocation2 + $0x34] sm:$0xf]
        %v514 = vld [vmem:[#allocation2 + $0x38] sm:$0xf]
        %v515 = vld [vmem:[#allocation2 + $0x3c] sm:$0xf]
        %532 = vrot.lane.b32.xlu0 %v500, 126
        %v533 = vpop.permute.xlu0 %532
        %534 = vrot.lane.b32.xlu0 %v501, 126
        %v535 = vpop.permute.xlu0 %534
        %536 = vrot.lane.b32.xlu0 %v502, 126
        %v537 = vpop.permute.xlu0 %536
        %538 = vrot.lane.b32.xlu0 %v503, 126
        %v539 = vpop.permute.xlu0 %538
        %540 = vrot.lane.b32.xlu0 %v504, 126
        %v541 = vpop.permute.xlu0 %540
        %542 = vrot.lane.b32.xlu0 %v505, 126
        %v543 = vpop.permute.xlu0 %542
        %544 = vrot.lane.b32.xlu0 %v506, 126
        %v545 = vpop.permute.xlu0 %544
        %546 = vrot.lane.b32.xlu0 %v507, 126
        %v547 = vpop.permute.xlu0 %546
        %548 = vrot.lane.b32.xlu0 %v508, 126
        %v549 = vpop.permute.xlu0 %548
        %550 = vrot.lane.b32.xlu0 %v509, 126
        %v551 = vpop.permute.xlu0 %550
        %552 = vrot.lane.b32.xlu0 %v510, 126
        %v553 = vpop.permute.xlu0 %552
        %554 = vrot.lane.b32.xlu0 %v511, 126
        %v555 = vpop.permute.xlu0 %554
        %556 = vrot.lane.b32.xlu0 %v512, 126
        %v557 = vpop.permute.xlu0 %556
        %558 = vrot.lane.b32.xlu0 %v513, 126
        %v559 = vpop.permute.xlu0 %558
        %560 = vrot.lane.b32.xlu0 %v514, 126
        %v561 = vpop.permute.xlu0 %560
        %562 = vrot.lane.b32.xlu0 %v515, 126
        %v563 = vpop.permute.xlu0 %562
        %580 = vst.msk [vmem:[#allocation3 + $0x8] sm:$0xf] %vm387, %v533
        %581 = vst.msk [vmem:[#allocation3 + $0x30] sm:$0xf] %vm387, %v535
        %582 = vst.msk [vmem:[#allocation3 + $0x58] sm:$0xf] %vm387, %v537
        %583 = vst.msk [vmem:[#allocation3 + $0x80] sm:$0xf] %vm387, %v539
        %584 = vst.msk [vmem:[#allocation3 + $0xa8] sm:$0xf] %vm387, %v541
        %585 = vst.msk [vmem:[#allocation3 + $0xd0] sm:$0xf] %vm387, %v543
        %586 = vst.msk [vmem:[#allocation3 + $0xf8] sm:$0xf] %vm387, %v545
        %587 = vst.msk [vmem:[#allocation3 + $0x120] sm:$0xf] %vm387, %v547
        %588 = vst.msk [vmem:[#allocation3 + $0x148] sm:$0xf] %vm387, %v549
        %589 = vst.msk [vmem:[#allocation3 + $0x170] sm:$0xf] %vm387, %v551
        %590 = vst.msk [vmem:[#allocation3 + $0x198] sm:$0xf] %vm387, %v553
        %591 = vst.msk [vmem:[#allocation3 + $0x1c0] sm:$0xf] %vm387, %v555
        %592 = vst.msk [vmem:[#allocation3 + $0x1e8] sm:$0xf] %vm387, %v557
        %593 = vst.msk [vmem:[#allocation3 + $0x210] sm:$0xf] %vm387, %v559
        %594 = vst.msk [vmem:[#allocation3 + $0x238] sm:$0xf] %vm387, %v561
        %595 = vst.msk [vmem:[#allocation3 + $0x260] sm:$0xf] %vm387, %v563
        %v596 = vld [vmem:[%s353] sm:$0xf]
        %v597 = vld [vmem:[%s353 + $0x4] sm:$0xf]
        %v598 = vld [vmem:[%s353 + $0x8] sm:$0xf]
        %v599 = vld [vmem:[%s353 + $0xc] sm:$0xf]
        %v600 = vld [vmem:[%s353 + $0x10] sm:$0xf]
        %v601 = vld [vmem:[%s353 + $0x14] sm:$0xf]
        %v602 = vld [vmem:[%s353 + $0x18] sm:$0xf]
        %v603 = vld [vmem:[%s353 + $0x1c] sm:$0xf]
        %v604 = vld [vmem:[%s353 + $0x20] sm:$0xf]
        %v605 = vld [vmem:[%s353 + $0x24] sm:$0xf]
        %v606 = vld [vmem:[%s353 + $0x28] sm:$0xf]
        %v607 = vld [vmem:[%s353 + $0x2c] sm:$0xf]
        %v608 = vld [vmem:[%s353 + $0x30] sm:$0xf]
        %v609 = vld [vmem:[%s353 + $0x34] sm:$0xf]
        %v610 = vld [vmem:[%s353 + $0x38] sm:$0xf]
        %v611 = vld [vmem:[%s353 + $0x3c] sm:$0xf]
        %612 = vst.msk [vmem:[#allocation3 + $0xc] sm:$0xf] %vm387, %v596
        %613 = vst.msk [vmem:[#allocation3 + $0x34] sm:$0xf] %vm387, %v597
        %614 = vst.msk [vmem:[#allocation3 + $0x5c] sm:$0xf] %vm387, %v598
        %615 = vst.msk [vmem:[#allocation3 + $0x84] sm:$0xf] %vm387, %v599
        %616 = vst.msk [vmem:[#allocation3 + $0xac] sm:$0xf] %vm387, %v600
        %617 = vst.msk [vmem:[#allocation3 + $0xd4] sm:$0xf] %vm387, %v601
        %618 = vst.msk [vmem:[#allocation3 + $0xfc] sm:$0xf] %vm387, %v602
        %619 = vst.msk [vmem:[#allocation3 + $0x124] sm:$0xf] %vm387, %v603
        %620 = vst.msk [vmem:[#allocation3 + $0x14c] sm:$0xf] %vm387, %v604
        %621 = vst.msk [vmem:[#allocation3 + $0x174] sm:$0xf] %vm387, %v605
        %622 = vst.msk [vmem:[#allocation3 + $0x19c] sm:$0xf] %vm387, %v606
        %623 = vst.msk [vmem:[#allocation3 + $0x1c4] sm:$0xf] %vm387, %v607
        %624 = vst.msk [vmem:[#allocation3 + $0x1ec] sm:$0xf] %vm387, %v608
        %625 = vst.msk [vmem:[#allocation3 + $0x214] sm:$0xf] %vm387, %v609
        %626 = vst.msk [vmem:[#allocation3 + $0x23c] sm:$0xf] %vm387, %v610
        %627 = vst.msk [vmem:[#allocation3 + $0x264] sm:$0xf] %vm387, %v611
        %v628 = vld [vmem:[%s353] sm:$0xf]
        %v629 = vld [vmem:[%s353 + $0x4] sm:$0xf]
        %v630 = vld [vmem:[%s353 + $0x8] sm:$0xf]
        %v631 = vld [vmem:[%s353 + $0xc] sm:$0xf]
        %v632 = vld [vmem:[%s353 + $0x10] sm:$0xf]
        %v633 = vld [vmem:[%s353 + $0x14] sm:$0xf]
        %v634 = vld [vmem:[%s353 + $0x18] sm:$0xf]
        %v635 = vld [vmem:[%s353 + $0x1c] sm:$0xf]
        %v636 = vld [vmem:[%s353 + $0x20] sm:$0xf]
        %v637 = vld [vmem:[%s353 + $0x24] sm:$0xf]
        %v638 = vld [vmem:[%s353 + $0x28] sm:$0xf]
        %v639 = vld [vmem:[%s353 + $0x2c] sm:$0xf]
        %v640 = vld [vmem:[%s353 + $0x30] sm:$0xf]
        %v641 = vld [vmem:[%s353 + $0x34] sm:$0xf]
        %v642 = vld [vmem:[%s353 + $0x38] sm:$0xf]
        %v643 = vld [vmem:[%s353 + $0x3c] sm:$0xf]
        %660 = vrot.lane.b32.xlu0 %v628, 127
        %v661 = vpop.permute.xlu0 %660
        %662 = vrot.lane.b32.xlu0 %v629, 127
        %v663 = vpop.permute.xlu0 %662
        %664 = vrot.lane.b32.xlu0 %v630, 127
        %v665 = vpop.permute.xlu0 %664
        %666 = vrot.lane.b32.xlu0 %v631, 127
        %v667 = vpop.permute.xlu0 %666
        %668 = vrot.lane.b32.xlu0 %v632, 127
        %v669 = vpop.permute.xlu0 %668
        %670 = vrot.lane.b32.xlu0 %v633, 127
        %v671 = vpop.permute.xlu0 %670
        %672 = vrot.lane.b32.xlu0 %v634, 127
        %v673 = vpop.permute.xlu0 %672
        %674 = vrot.lane.b32.xlu0 %v635, 127
        %v675 = vpop.permute.xlu0 %674
        %676 = vrot.lane.b32.xlu0 %v636, 127
        %v677 = vpop.permute.xlu0 %676
        %678 = vrot.lane.b32.xlu0 %v637, 127
        %v679 = vpop.permute.xlu0 %678
        %680 = vrot.lane.b32.xlu0 %v638, 127
        %v681 = vpop.permute.xlu0 %680
        %682 = vrot.lane.b32.xlu0 %v639, 127
        %v683 = vpop.permute.xlu0 %682
        %684 = vrot.lane.b32.xlu0 %v640, 127
        %v685 = vpop.permute.xlu0 %684
        %686 = vrot.lane.b32.xlu0 %v641, 127
        %v687 = vpop.permute.xlu0 %686
        %688 = vrot.lane.b32.xlu0 %v642, 127
        %v689 = vpop.permute.xlu0 %688
        %690 = vrot.lane.b32.xlu0 %v643, 127
        %v691 = vpop.permute.xlu0 %690
        %708 = vst.msk [vmem:[#allocation3 + $0x10] sm:$0xf] %vm387, %v661
        %709 = vst.msk [vmem:[#allocation3 + $0x38] sm:$0xf] %vm387, %v663
        %710 = vst.msk [vmem:[#allocation3 + $0x60] sm:$0xf] %vm387, %v665
        %711 = vst.msk [vmem:[#allocation3 + $0x88] sm:$0xf] %vm387, %v667
        %712 = vst.msk [vmem:[#allocation3 + $0xb0] sm:$0xf] %vm387, %v669
        %713 = vst.msk [vmem:[#allocation3 + $0xd8] sm:$0xf] %vm387, %v671
        %714 = vst.msk [vmem:[#allocation3 + $0x100] sm:$0xf] %vm387, %v673
        %715 = vst.msk [vmem:[#allocation3 + $0x128] sm:$0xf] %vm387, %v675
        %716 = vst.msk [vmem:[#allocation3 + $0x150] sm:$0xf] %vm387, %v677
        %717 = vst.msk [vmem:[#allocation3 + $0x178] sm:$0xf] %vm387, %v679
        %718 = vst.msk [vmem:[#allocation3 + $0x1a0] sm:$0xf] %vm387, %v681
        %719 = vst.msk [vmem:[#allocation3 + $0x1c8] sm:$0xf] %vm387, %v683
        %720 = vst.msk [vmem:[#allocation3 + $0x1f0] sm:$0xf] %vm387, %v685
        %721 = vst.msk [vmem:[#allocation3 + $0x218] sm:$0xf] %vm387, %v687
        %722 = vst.msk [vmem:[#allocation3 + $0x240] sm:$0xf] %vm387, %v689
        %723 = vst.msk [vmem:[#allocation3 + $0x268] sm:$0xf] %vm387, %v691
        %v724 = vld [vmem:[%s353] sm:$0xf]
        %v725 = vld [vmem:[%s353 + $0x4] sm:$0xf]
        %v726 = vld [vmem:[%s353 + $0x8] sm:$0xf]
        %v727 = vld [vmem:[%s353 + $0xc] sm:$0xf]
        %v728 = vld [vmem:[%s353 + $0x10] sm:$0xf]
        %v729 = vld [vmem:[%s353 + $0x14] sm:$0xf]
        %v730 = vld [vmem:[%s353 + $0x18] sm:$0xf]
        %v731 = vld [vmem:[%s353 + $0x1c] sm:$0xf]
        %v732 = vld [vmem:[%s353 + $0x20] sm:$0xf]
        %v733 = vld [vmem:[%s353 + $0x24] sm:$0xf]
        %v734 = vld [vmem:[%s353 + $0x28] sm:$0xf]
        %v735 = vld [vmem:[%s353 + $0x2c] sm:$0xf]
        %v736 = vld [vmem:[%s353 + $0x30] sm:$0xf]
        %v737 = vld [vmem:[%s353 + $0x34] sm:$0xf]
        %v738 = vld [vmem:[%s353 + $0x38] sm:$0xf]
        %v739 = vld [vmem:[%s353 + $0x3c] sm:$0xf]
        %756 = vrot.lane.b32.xlu0 %v724, 126
        %v757 = vpop.permute.xlu0 %756
        %758 = vrot.lane.b32.xlu0 %v725, 126
        %v759 = vpop.permute.xlu0 %758
        %760 = vrot.lane.b32.xlu0 %v726, 126
        %v761 = vpop.permute.xlu0 %760
        %762 = vrot.lane.b32.xlu0 %v727, 126
        %v763 = vpop.permute.xlu0 %762
        %764 = vrot.lane.b32.xlu0 %v728, 126
        %v765 = vpop.permute.xlu0 %764
        %766 = vrot.lane.b32.xlu0 %v729, 126
        %v767 = vpop.permute.xlu0 %766
        %768 = vrot.lane.b32.xlu0 %v730, 126
        %v769 = vpop.permute.xlu0 %768
        %770 = vrot.lane.b32.xlu0 %v731, 126
        %v771 = vpop.permute.xlu0 %770
        %772 = vrot.lane.b32.xlu0 %v732, 126
        %v773 = vpop.permute.xlu0 %772
        %774 = vrot.lane.b32.xlu0 %v733, 126
        %v775 = vpop.permute.xlu0 %774
        %776 = vrot.lane.b32.xlu0 %v734, 126
        %v777 = vpop.permute.xlu0 %776
        %778 = vrot.lane.b32.xlu0 %v735, 126
        %v779 = vpop.permute.xlu0 %778
        %780 = vrot.lane.b32.xlu0 %v736, 126
        %v781 = vpop.permute.xlu0 %780
        %782 = vrot.lane.b32.xlu0 %v737, 126
        %v783 = vpop.permute.xlu0 %782
        %784 = vrot.lane.b32.xlu0 %v738, 126
        %v785 = vpop.permute.xlu0 %784
        %786 = vrot.lane.b32.xlu0 %v739, 126
        %v787 = vpop.permute.xlu0 %786
        %804 = vst.msk [vmem:[#allocation3 + $0x14] sm:$0xf] %vm387, %v757
        %805 = vst.msk [vmem:[#allocation3 + $0x3c] sm:$0xf] %vm387, %v759
        %806 = vst.msk [vmem:[#allocation3 + $0x64] sm:$0xf] %vm387, %v761
        %807 = vst.msk [vmem:[#allocation3 + $0x8c] sm:$0xf] %vm387, %v763
        %808 = vst.msk [vmem:[#allocation3 + $0xb4] sm:$0xf] %vm387, %v765
        %809 = vst.msk [vmem:[#allocation3 + $0xdc] sm:$0xf] %vm387, %v767
        %810 = vst.msk [vmem:[#allocation3 + $0x104] sm:$0xf] %vm387, %v769
        %811 = vst.msk [vmem:[#allocation3 + $0x12c] sm:$0xf] %vm387, %v771
        %812 = vst.msk [vmem:[#allocation3 + $0x154] sm:$0xf] %vm387, %v773
        %813 = vst.msk [vmem:[#allocation3 + $0x17c] sm:$0xf] %vm387, %v775
        %814 = vst.msk [vmem:[#allocation3 + $0x1a4] sm:$0xf] %vm387, %v777
        %815 = vst.msk [vmem:[#allocation3 + $0x1cc] sm:$0xf] %vm387, %v779
        %816 = vst.msk [vmem:[#allocation3 + $0x1f4] sm:$0xf] %vm387, %v781
        %817 = vst.msk [vmem:[#allocation3 + $0x21c] sm:$0xf] %vm387, %v783
        %818 = vst.msk [vmem:[#allocation3 + $0x244] sm:$0xf] %vm387, %v785
        %819 = vst.msk [vmem:[#allocation3 + $0x26c] sm:$0xf] %vm387, %v787
        %s820 = scalar_lea.vmem [#allocation2], 8
        %v821 = vld [vmem:[%s820] sm:$0xf]
        %v822 = vld [vmem:[%s820 + $0x4] sm:$0xf]
        %v823 = vld [vmem:[%s820 + $0x8] sm:$0xf]
        %v824 = vld [vmem:[%s820 + $0xc] sm:$0xf]
        %v825 = vld [vmem:[%s820 + $0x10] sm:$0xf]
        %v826 = vld [vmem:[%s820 + $0x14] sm:$0xf]
        %v827 = vld [vmem:[%s820 + $0x18] sm:$0xf]
        %v828 = vld [vmem:[%s820 + $0x1c] sm:$0xf]
        %v829 = vld [vmem:[%s820 + $0x20] sm:$0xf]
        %v830 = vld [vmem:[%s820 + $0x24] sm:$0xf]
        %v831 = vld [vmem:[%s820 + $0x28] sm:$0xf]
        %v832 = vld [vmem:[%s820 + $0x2c] sm:$0xf]
        %v833 = vld [vmem:[%s820 + $0x30] sm:$0xf]
        %v834 = vld [vmem:[%s820 + $0x34] sm:$0xf]
        %v835 = vld [vmem:[%s820 + $0x38] sm:$0xf]
        %v836 = vld [vmem:[%s820 + $0x3c] sm:$0xf]
        %837 = vst.msk [vmem:[#allocation3 + $0x18] sm:$0xf] %vm387, %v821
        %838 = vst.msk [vmem:[#allocation3 + $0x40] sm:$0xf] %vm387, %v822
        %839 = vst.msk [vmem:[#allocation3 + $0x68] sm:$0xf] %vm387, %v823
        %840 = vst.msk [vmem:[#allocation3 + $0x90] sm:$0xf] %vm387, %v824
        %841 = vst.msk [vmem:[#allocation3 + $0xb8] sm:$0xf] %vm387, %v825
        %842 = vst.msk [vmem:[#allocation3 + $0xe0] sm:$0xf] %vm387, %v826
        %843 = vst.msk [vmem:[#allocation3 + $0x108] sm:$0xf] %vm387, %v827
        %844 = vst.msk [vmem:[#allocation3 + $0x130] sm:$0xf] %vm387, %v828
        %845 = vst.msk [vmem:[#allocation3 + $0x158] sm:$0xf] %vm387, %v829
        %846 = vst.msk [vmem:[#allocation3 + $0x180] sm:$0xf] %vm387, %v830
        %847 = vst.msk [vmem:[#allocation3 + $0x1a8] sm:$0xf] %vm387, %v831
        %848 = vst.msk [vmem:[#allocation3 + $0x1d0] sm:$0xf] %vm387, %v832
        %849 = vst.msk [vmem:[#allocation3 + $0x1f8] sm:$0xf] %vm387, %v833
        %850 = vst.msk [vmem:[#allocation3 + $0x220] sm:$0xf] %vm387, %v834
        %851 = vst.msk [vmem:[#allocation3 + $0x248] sm:$0xf] %vm387, %v835
        %852 = vst.msk [vmem:[#allocation3 + $0x270] sm:$0xf] %vm387, %v836
        %v853 = vld [vmem:[%s820] sm:$0xf]
        %v854 = vld [vmem:[%s820 + $0x4] sm:$0xf]
        %v855 = vld [vmem:[%s820 + $0x8] sm:$0xf]
        %v856 = vld [vmem:[%s820 + $0xc] sm:$0xf]
        %v857 = vld [vmem:[%s820 + $0x10] sm:$0xf]
        %v858 = vld [vmem:[%s820 + $0x14] sm:$0xf]
        %v859 = vld [vmem:[%s820 + $0x18] sm:$0xf]
        %v860 = vld [vmem:[%s820 + $0x1c] sm:$0xf]
        %v861 = vld [vmem:[%s820 + $0x20] sm:$0xf]
        %v862 = vld [vmem:[%s820 + $0x24] sm:$0xf]
        %v863 = vld [vmem:[%s820 + $0x28] sm:$0xf]
        %v864 = vld [vmem:[%s820 + $0x2c] sm:$0xf]
        %v865 = vld [vmem:[%s820 + $0x30] sm:$0xf]
        %v866 = vld [vmem:[%s820 + $0x34] sm:$0xf]
        %v867 = vld [vmem:[%s820 + $0x38] sm:$0xf]
        %v868 = vld [vmem:[%s820 + $0x3c] sm:$0xf]
        %885 = vrot.lane.b32.xlu0 %v853, 127
        %v886 = vpop.permute.xlu0 %885
        %887 = vrot.lane.b32.xlu0 %v854, 127
        %v888 = vpop.permute.xlu0 %887
        %889 = vrot.lane.b32.xlu0 %v855, 127
        %v890 = vpop.permute.xlu0 %889
        %891 = vrot.lane.b32.xlu0 %v856, 127
        %v892 = vpop.permute.xlu0 %891
        %893 = vrot.lane.b32.xlu0 %v857, 127
        %v894 = vpop.permute.xlu0 %893
        %895 = vrot.lane.b32.xlu0 %v858, 127
        %v896 = vpop.permute.xlu0 %895
        %897 = vrot.lane.b32.xlu0 %v859, 127
        %v898 = vpop.permute.xlu0 %897
        %899 = vrot.lane.b32.xlu0 %v860, 127
        %v900 = vpop.permute.xlu0 %899
        %901 = vrot.lane.b32.xlu0 %v861, 127
        %v902 = vpop.permute.xlu0 %901
        %903 = vrot.lane.b32.xlu0 %v862, 127
        %v904 = vpop.permute.xlu0 %903
        %905 = vrot.lane.b32.xlu0 %v863, 127
        %v906 = vpop.permute.xlu0 %905
        %907 = vrot.lane.b32.xlu0 %v864, 127
        %v908 = vpop.permute.xlu0 %907
        %909 = vrot.lane.b32.xlu0 %v865, 127
        %v910 = vpop.permute.xlu0 %909
        %911 = vrot.lane.b32.xlu0 %v866, 127
        %v912 = vpop.permute.xlu0 %911
        %913 = vrot.lane.b32.xlu0 %v867, 127
        %v914 = vpop.permute.xlu0 %913
        %915 = vrot.lane.b32.xlu0 %v868, 127
        %v916 = vpop.permute.xlu0 %915
        %933 = vst.msk [vmem:[#allocation3 + $0x1c] sm:$0xf] %vm387, %v886
        %934 = vst.msk [vmem:[#allocation3 + $0x44] sm:$0xf] %vm387, %v888
        %935 = vst.msk [vmem:[#allocation3 + $0x6c] sm:$0xf] %vm387, %v890
        %936 = vst.msk [vmem:[#allocation3 + $0x94] sm:$0xf] %vm387, %v892
        %937 = vst.msk [vmem:[#allocation3 + $0xbc] sm:$0xf] %vm387, %v894
        %938 = vst.msk [vmem:[#allocation3 + $0xe4] sm:$0xf] %vm387, %v896
        %939 = vst.msk [vmem:[#allocation3 + $0x10c] sm:$0xf] %vm387, %v898
        %940 = vst.msk [vmem:[#allocation3 + $0x134] sm:$0xf] %vm387, %v900
        %941 = vst.msk [vmem:[#allocation3 + $0x15c] sm:$0xf] %vm387, %v902
        %942 = vst.msk [vmem:[#allocation3 + $0x184] sm:$0xf] %vm387, %v904
        %943 = vst.msk [vmem:[#allocation3 + $0x1ac] sm:$0xf] %vm387, %v906
        %944 = vst.msk [vmem:[#allocation3 + $0x1d4] sm:$0xf] %vm387, %v908
        %945 = vst.msk [vmem:[#allocation3 + $0x1fc] sm:$0xf] %vm387, %v910
        %946 = vst.msk [vmem:[#allocation3 + $0x224] sm:$0xf] %vm387, %v912
        %947 = vst.msk [vmem:[#allocation3 + $0x24c] sm:$0xf] %vm387, %v914
        %948 = vst.msk [vmem:[#allocation3 + $0x274] sm:$0xf] %vm387, %v916
        %v949 = vld [vmem:[%s820] sm:$0xf]
        %v950 = vld [vmem:[%s820 + $0x4] sm:$0xf]
        %v951 = vld [vmem:[%s820 + $0x8] sm:$0xf]
        %v952 = vld [vmem:[%s820 + $0xc] sm:$0xf]
        %v953 = vld [vmem:[%s820 + $0x10] sm:$0xf]
        %v954 = vld [vmem:[%s820 + $0x14] sm:$0xf]
        %v955 = vld [vmem:[%s820 + $0x18] sm:$0xf]
        %v956 = vld [vmem:[%s820 + $0x1c] sm:$0xf]
        %v957 = vld [vmem:[%s820 + $0x20] sm:$0xf]
        %v958 = vld [vmem:[%s820 + $0x24] sm:$0xf]
        %v959 = vld [vmem:[%s820 + $0x28] sm:$0xf]
        %v960 = vld [vmem:[%s820 + $0x2c] sm:$0xf]
        %v961 = vld [vmem:[%s820 + $0x30] sm:$0xf]
        %v962 = vld [vmem:[%s820 + $0x34] sm:$0xf]
        %v963 = vld [vmem:[%s820 + $0x38] sm:$0xf]
        %v964 = vld [vmem:[%s820 + $0x3c] sm:$0xf]
        %981 = vrot.lane.b32.xlu0 %v949, 126
        %v982 = vpop.permute.xlu0 %981
        %983 = vrot.lane.b32.xlu0 %v950, 126
        %v984 = vpop.permute.xlu0 %983
        %985 = vrot.lane.b32.xlu0 %v951, 126
        %v986 = vpop.permute.xlu0 %985
        %987 = vrot.lane.b32.xlu0 %v952, 126
        %v988 = vpop.permute.xlu0 %987
        %989 = vrot.lane.b32.xlu0 %v953, 126
        %v990 = vpop.permute.xlu0 %989
        %991 = vrot.lane.b32.xlu0 %v954, 126
        %v992 = vpop.permute.xlu0 %991
        %993 = vrot.lane.b32.xlu0 %v955, 126
        %v994 = vpop.permute.xlu0 %993
        %995 = vrot.lane.b32.xlu0 %v956, 126
        %v996 = vpop.permute.xlu0 %995
        %997 = vrot.lane.b32.xlu0 %v957, 126
        %v998 = vpop.permute.xlu0 %997
        %999 = vrot.lane.b32.xlu0 %v958, 126
        %v1000 = vpop.permute.xlu0 %999
        %1001 = vrot.lane.b32.xlu0 %v959, 126
        %v1002 = vpop.permute.xlu0 %1001
        %1003 = vrot.lane.b32.xlu0 %v960, 126
        %v1004 = vpop.permute.xlu0 %1003
        %1005 = vrot.lane.b32.xlu0 %v961, 126
        %v1006 = vpop.permute.xlu0 %1005
        %1007 = vrot.lane.b32.xlu0 %v962, 126
        %v1008 = vpop.permute.xlu0 %1007
        %1009 = vrot.lane.b32.xlu0 %v963, 126
        %v1010 = vpop.permute.xlu0 %1009
        %1011 = vrot.lane.b32.xlu0 %v964, 126
        %v1012 = vpop.permute.xlu0 %1011
        %1029 = vst.msk [vmem:[#allocation3 + $0x20] sm:$0xf] %vm387, %v982
        %1030 = vst.msk [vmem:[#allocation3 + $0x48] sm:$0xf] %vm387, %v984
        %1031 = vst.msk [vmem:[#allocation3 + $0x70] sm:$0xf] %vm387, %v986
        %1032 = vst.msk [vmem:[#allocation3 + $0x98] sm:$0xf] %vm387, %v988
        %1033 = vst.msk [vmem:[#allocation3 + $0xc0] sm:$0xf] %vm387, %v990
        %1034 = vst.msk [vmem:[#allocation3 + $0xe8] sm:$0xf] %vm387, %v992
        %1035 = vst.msk [vmem:[#allocation3 + $0x110] sm:$0xf] %vm387, %v994
        %1036 = vst.msk [vmem:[#allocation3 + $0x138] sm:$0xf] %vm387, %v996
        %1037 = vst.msk [vmem:[#allocation3 + $0x160] sm:$0xf] %vm387, %v998
        %1038 = vst.msk [vmem:[#allocation3 + $0x188] sm:$0xf] %vm387, %v1000
        %1039 = vst.msk [vmem:[#allocation3 + $0x1b0] sm:$0xf] %vm387, %v1002
        %1040 = vst.msk [vmem:[#allocation3 + $0x1d8] sm:$0xf] %vm387, %v1004
        %1041 = vst.msk [vmem:[#allocation3 + $0x200] sm:$0xf] %vm387, %v1006
        %1042 = vst.msk [vmem:[#allocation3 + $0x228] sm:$0xf] %vm387, %v1008
        %1043 = vst.msk [vmem:[#allocation3 + $0x250] sm:$0xf] %vm387, %v1010
        %1044 = vst.msk [vmem:[#allocation3 + $0x278] sm:$0xf] %vm387, %v1012
        %v1045 = vld [vmem:[%s222] sm:$0xf]
        %v1046 = vld [vmem:[#allocation3] sm:$0xff]
        %v1047 = vld [vmem:[#allocation3 + $0x8] sm:$0xff]
        %v1048 = vld [vmem:[#allocation3 + $0x10] sm:$0xff]
        %v1049 = vld [vmem:[#allocation3 + $0x18] sm:$0xff]
        %v1050 = vld [vmem:[#allocation3 + $0x20] sm:$0xf]
        %v1051 = vld [vmem:[#allocation3 + $0x28] sm:$0xff]
        %v1052 = vld [vmem:[#allocation3 + $0x30] sm:$0xff]
        %v1053 = vld [vmem:[#allocation3 + $0x38] sm:$0xff]
        %v1054 = vld [vmem:[#allocation3 + $0x40] sm:$0xff]
        %v1055 = vld [vmem:[#allocation3 + $0x48] sm:$0xf]
        %v1056 = vld [vmem:[#allocation3 + $0x50] sm:$0xff]
        %v1057 = vld [vmem:[#allocation3 + $0x58] sm:$0xff]
        %v1058 = vld [vmem:[#allocation3 + $0x60] sm:$0xff]
        %v1059 = vld [vmem:[#allocation3 + $0x68] sm:$0xff]
        %v1060 = vld [vmem:[#allocation3 + $0x70] sm:$0xf]
        %v1061 = vld [vmem:[#allocation3 + $0x78] sm:$0xff]
        %v1062 = vld [vmem:[#allocation3 + $0x80] sm:$0xff]
        %v1063 = vld [vmem:[#allocation3 + $0x88] sm:$0xff]
        %v1064 = vld [vmem:[#allocation3 + $0x90] sm:$0xff]
        %v1065 = vld [vmem:[#allocation3 + $0x98] sm:$0xf]
        %v1066 = vld [vmem:[#allocation3 + $0xa0] sm:$0xff]
        %v1067 = vld [vmem:[#allocation3 + $0xa8] sm:$0xff]
        %v1068 = vld [vmem:[#allocation3 + $0xb0] sm:$0xff]
        %v1069 = vld [vmem:[#allocation3 + $0xb8] sm:$0xff]
        %v1070 = vld [vmem:[#allocation3 + $0xc0] sm:$0xf]
        %v1071 = vld [vmem:[#allocation3 + $0xc8] sm:$0xff]
        %v1072 = vld [vmem:[#allocation3 + $0xd0] sm:$0xff]
        %v1073 = vld [vmem:[#allocation3 + $0xd8] sm:$0xff]
        %v1074 = vld [vmem:[#allocation3 + $0xe0] sm:$0xff]
        %v1075 = vld [vmem:[#allocation3 + $0xe8] sm:$0xf]
        %v1076 = vld [vmem:[#allocation3 + $0xf0] sm:$0xff]
        %v1077 = vld [vmem:[#allocation3 + $0xf8] sm:$0xff]
        %v1078 = vld [vmem:[#allocation3 + $0x100] sm:$0xff]
        %v1079 = vld [vmem:[#allocation3 + $0x108] sm:$0xff]
        %v1080 = vld [vmem:[#allocation3 + $0x110] sm:$0xf]
        %v1081 = vld [vmem:[#allocation3 + $0x118] sm:$0xff]
        %v1082 = vld [vmem:[#allocation3 + $0x120] sm:$0xff]
        %v1083 = vld [vmem:[#allocation3 + $0x128] sm:$0xff]
        %v1084 = vld [vmem:[#allocation3 + $0x130] sm:$0xff]
        %v1085 = vld [vmem:[#allocation3 + $0x138] sm:$0xf]
        %v1086 = vld [vmem:[#allocation3 + $0x140] sm:$0xff]
        %v1087 = vld [vmem:[#allocation3 + $0x148] sm:$0xff]
        %v1088 = vld [vmem:[#allocation3 + $0x150] sm:$0xff]
        %v1089 = vld [vmem:[#allocation3 + $0x158] sm:$0xff]
        %v1090 = vld [vmem:[#allocation3 + $0x160] sm:$0xf]
        %v1091 = vld [vmem:[#allocation3 + $0x168] sm:$0xff]
        %v1092 = vld [vmem:[#allocation3 + $0x170] sm:$0xff]
        %v1093 = vld [vmem:[#allocation3 + $0x178] sm:$0xff]
        %v1094 = vld [vmem:[#allocation3 + $0x180] sm:$0xff]
        %v1095 = vld [vmem:[#allocation3 + $0x188] sm:$0xf]
        %v1096 = vld [vmem:[#allocation3 + $0x190] sm:$0xff]
        %v1097 = vld [vmem:[#allocation3 + $0x198] sm:$0xff]
        %v1098 = vld [vmem:[#allocation3 + $0x1a0] sm:$0xff]
        %v1099 = vld [vmem:[#allocation3 + $0x1a8] sm:$0xff]
        %v1100 = vld [vmem:[#allocation3 + $0x1b0] sm:$0xf]
        %v1101 = vld [vmem:[#allocation3 + $0x1b8] sm:$0xff]
        %v1102 = vld [vmem:[#allocation3 + $0x1c0] sm:$0xff]
        %v1103 = vld [vmem:[#allocation3 + $0x1c8] sm:$0xff]
        %v1104 = vld [vmem:[#allocation3 + $0x1d0] sm:$0xff]
        %v1105 = vld [vmem:[#allocation3 + $0x1d8] sm:$0xf]
        %v1106 = vld [vmem:[#allocation3 + $0x1e0] sm:$0xff]
        %v1107 = vld [vmem:[#allocation3 + $0x1e8] sm:$0xff]
        %v1108 = vld [vmem:[#allocation3 + $0x1f0] sm:$0xff]
        %v1109 = vld [vmem:[#allocation3 + $0x1f8] sm:$0xff]
        %v1110 = vld [vmem:[#allocation3 + $0x200] sm:$0xf]
        %v1111 = vld [vmem:[#allocation3 + $0x208] sm:$0xff]
        %v1112 = vld [vmem:[#allocation3 + $0x210] sm:$0xff]
        %v1113 = vld [vmem:[#allocation3 + $0x218] sm:$0xff]
        %v1114 = vld [vmem:[#allocation3 + $0x220] sm:$0xff]
        %v1115 = vld [vmem:[#allocation3 + $0x228] sm:$0xf]
        %v1116 = vld [vmem:[#allocation3 + $0x230] sm:$0xff]
        %v1117 = vld [vmem:[#allocation3 + $0x238] sm:$0xff]
        %v1118 = vld [vmem:[#allocation3 + $0x240] sm:$0xff]
        %v1119 = vld [vmem:[#allocation3 + $0x248] sm:$0xff]
        %v1120 = vld [vmem:[#allocation3 + $0x250] sm:$0xf]
        %v1121 = vld [vmem:[#allocation3 + $0x258] sm:$0xff]
        %v1122 = vld [vmem:[#allocation3 + $0x260] sm:$0xff]
        %v1123 = vld [vmem:[#allocation3 + $0x268] sm:$0xff]
        %v1124 = vld [vmem:[#allocation3 + $0x270] sm:$0xff]
        %v1125 = vld [vmem:[#allocation3 + $0x278] sm:$0xf]
        %vm1126 = vcmask 293888
        %v1128 = vsel %vm1126, %v1045, 0
        %vm1130 = vcmask 1043456
        %v1132 = vsel %vm1130, %v1050, 0
        %1134 = vmatprep.subr.mxu0 0.0
        %1135 = vmatpush1.msra.mxu0 %v1046
        %1136 = vmatprep.subr.mxu0 0.0
        %1137 = vmatpush1.msra.mxu0 %v1047
        %1138 = vmatprep.subr.mxu0 0.0
        %1139 = vmatpush1.msra.mxu0 %v1048
        %1140 = vmatprep.subr.mxu0 0.0
        %1141 = vmatpush1.msra.mxu0 %v1049
        %1142 = vmatprep.subr.mxu0 0.0
        %1143 = vmatpush1.msra.mxu0 %v1132
        %1144 = vmatprep.subr.mxu0 0.0
        %1145 = vmatpush1.msra.mxu0 0.0
        %1146 = vmatprep.subr.mxu0 0.0
        %1147 = vmatpush1.msra.mxu0 0.0
        %1148 = vmatprep.subr.mxu0 0.0
        %1149 = vmatpush1.msra.mxu0 0.0
        %1150 = vmatprep.subr.mxu0 0.0
        %1151 = vmatpush1.msra.mxu0 0.0
        %1152 = vmatprep.subr.mxu0 0.0
        %1153 = vmatpush1.msra.mxu0 0.0
        %1154 = vmatprep.subr.mxu0 0.0
        %1155 = vmatpush1.msra.mxu0 0.0
        %1156 = vmatprep.subr.mxu0 0.0
        %1157 = vmatpush1.msra.mxu0 0.0
        %1158 = vmatprep.subr.mxu0 0.0
        %1159 = vmatpush1.msra.mxu0 0.0
        %1160 = vmatprep.subr.mxu0 0.0
        %1161 = vmatpush1.msra.mxu0 0.0
        %1162 = vmatprep.subr.mxu0 0.0
        %1163 = vmatpush1.msra.mxu0 0.0
        %1164 = vmatprep.subr.mxu0 0.0
        %1165 = vmatpush1.msra.mxu0 0.0
        %1166 = vmatprep.subr.mxu0 0.0
        %1167 = vmatpush1.msra.mxu0 0.0
        %1168 = vmatprep.subr.mxu0 0.0
        %1169 = vmatpush1.msra.mxu0 0.0
        %1170 = vmatprep.subr.mxu0 0.0
        %1171 = vmatpush1.msra.mxu0 0.0
        %1172 = vmatprep.subr.mxu0 0.0
        %1173 = vmatpush1.msra.mxu0 0.0
        %1174 = vmatprep.subr.mxu0 0.0
        %1175 = vmatpush1.msra.mxu0 0.0
        %1176 = vmatprep.subr.mxu0 0.0
        %1177 = vmatpush1.msra.mxu0 0.0
        %1178 = vmatprep.subr.mxu0 0.0
        %1179 = vmatpush1.msra.mxu0 0.0
        %1180 = vmatprep.subr.mxu0 0.0
        %1181 = vmatpush1.msra.mxu0 0.0
        %1182 = vmatprep.subr.mxu0 0.0
        %1183 = vmatpush1.msra.mxu0 0.0
        %1184 = vmatprep.subr.mxu0 0.0
        %1185 = vmatpush1.msra.mxu0 0.0
        %1186 = vmatprep.subr.mxu0 0.0
        %1187 = vmatpush1.msra.mxu0 0.0
        %1188 = vmatprep.subr.mxu0 0.0
        %1189 = vmatpush1.msra.mxu0 0.0
        %1190 = vmatprep.subr.mxu0 0.0
        %1191 = vmatpush1.msra.mxu0 0.0
        %1192 = vmatprep.subr.mxu0 0.0
        %1193 = vmatpush1.msra.mxu0 0.0
        %1194 = vmatprep.subr.mxu0 0.0
        %1195 = vmatpush1.msra.mxu0 0.0
        %1196 = vmatprep.subr.mxu0 0.0
        %1197 = vmatpush1.msra.mxu0 0.0
        %1198 = vmatprep.mubr.f32.mxu0 0.0
        %1199 = vmatmul.mubr.f32.gmra.mrb[0].mxu0 %v1128
        %v1200 = vpop.f32.mrb[0].mxu0
        %v1201 = vadd.f32 0.0, %v1200
        %v1202 = vpop.f32.mrb[0].mxu0
        %1203 = vdwg.mxu0
        %v1205 = vsel %vm1130, %v1055, 0
        %1207 = vmatprep.subr.mxu0 0.0
        %1208 = vmatpush1.msra.mxu0 %v1051
        %1209 = vmatprep.subr.mxu0 0.0
        %1210 = vmatpush1.msra.mxu0 %v1052
        %1211 = vmatprep.subr.mxu0 0.0
        %1212 = vmatpush1.msra.mxu0 %v1053
        %1213 = vmatprep.subr.mxu0 0.0
        %1214 = vmatpush1.msra.mxu0 %v1054
        %1215 = vmatprep.subr.mxu0 0.0
        %1216 = vmatpush1.msra.mxu0 %v1205
        %1217 = vmatprep.subr.mxu0 0.0
        %1218 = vmatpush1.msra.mxu0 0.0
        %1219 = vmatprep.subr.mxu0 0.0
        %1220 = vmatpush1.msra.mxu0 0.0
        %1221 = vmatprep.subr.mxu0 0.0
        %1222 = vmatpush1.msra.mxu0 0.0
        %1223 = vmatprep.subr.mxu0 0.0
        %1224 = vmatpush1.msra.mxu0 0.0
        %1225 = vmatprep.subr.mxu0 0.0
        %1226 = vmatpush1.msra.mxu0 0.0
        %1227 = vmatprep.subr.mxu0 0.0
        %1228 = vmatpush1.msra.mxu0 0.0
        %1229 = vmatprep.subr.mxu0 0.0
        %1230 = vmatpush1.msra.mxu0 0.0
        %1231 = vmatprep.subr.mxu0 0.0
        %1232 = vmatpush1.msra.mxu0 0.0
        %1233 = vmatprep.subr.mxu0 0.0
        %1234 = vmatpush1.msra.mxu0 0.0
        %1235 = vmatprep.subr.mxu0 0.0
        %1236 = vmatpush1.msra.mxu0 0.0
        %1237 = vmatprep.subr.mxu0 0.0
        %1238 = vmatpush1.msra.mxu0 0.0
        %1239 = vmatprep.subr.mxu0 0.0
        %1240 = vmatpush1.msra.mxu0 0.0
        %1241 = vmatprep.subr.mxu0 0.0
        %1242 = vmatpush1.msra.mxu0 0.0
        %1243 = vmatprep.subr.mxu0 0.0
        %1244 = vmatpush1.msra.mxu0 0.0
        %1245 = vmatprep.subr.mxu0 0.0
        %1246 = vmatpush1.msra.mxu0 0.0
        %1247 = vmatprep.subr.mxu0 0.0
        %1248 = vmatpush1.msra.mxu0 0.0
        %1249 = vmatprep.subr.mxu0 0.0
        %1250 = vmatpush1.msra.mxu0 0.0
        %1251 = vmatprep.subr.mxu0 0.0
        %1252 = vmatpush1.msra.mxu0 0.0
        %1253 = vmatprep.subr.mxu0 0.0
        %1254 = vmatpush1.msra.mxu0 0.0
        %1255 = vmatprep.subr.mxu0 0.0
        %1256 = vmatpush1.msra.mxu0 0.0
        %1257 = vmatprep.subr.mxu0 0.0
        %1258 = vmatpush1.msra.mxu0 0.0
        %1259 = vmatprep.subr.mxu0 0.0
        %1260 = vmatpush1.msra.mxu0 0.0
        %1261 = vmatprep.subr.mxu0 0.0
        %1262 = vmatpush1.msra.mxu0 0.0
        %1263 = vmatprep.subr.mxu0 0.0
        %1264 = vmatpush1.msra.mxu0 0.0
        %1265 = vmatprep.subr.mxu0 0.0
        %1266 = vmatpush1.msra.mxu0 0.0
        %1267 = vmatprep.subr.mxu0 0.0
        %1268 = vmatpush1.msra.mxu0 0.0
        %1269 = vmatprep.subr.mxu0 0.0
        %1270 = vmatpush1.msra.mxu0 0.0
        %1271 = vmatprep.mubr.f32.mxu0 0.0
        %1272 = vmatmul.mubr.f32.gmra.mrb[0].mxu0 %v1128
        %v1273 = vpop.f32.mrb[0].mxu0
        %v1274 = vadd.f32 0.0, %v1273
        %v1275 = vpop.f32.mrb[0].mxu0
        %1276 = vdwg.mxu0
        %v1278 = vsel %vm1130, %v1060, 0
        %1280 = vmatprep.subr.mxu0 0.0
        %1281 = vmatpush1.msra.mxu0 %v1056
        %1282 = vmatprep.subr.mxu0 0.0
        %1283 = vmatpush1.msra.mxu0 %v1057
        %1284 = vmatprep.subr.mxu0 0.0
        %1285 = vmatpush1.msra.mxu0 %v1058
        %1286 = vmatprep.subr.mxu0 0.0
        %1287 = vmatpush1.msra.mxu0 %v1059
        %1288 = vmatprep.subr.mxu0 0.0
        %1289 = vmatpush1.msra.mxu0 %v1278
        %1290 = vmatprep.subr.mxu0 0.0
        %1291 = vmatpush1.msra.mxu0 0.0
        %1292 = vmatprep.subr.mxu0 0.0
        %1293 = vmatpush1.msra.mxu0 0.0
        %1294 = vmatprep.subr.mxu0 0.0
        %1295 = vmatpush1.msra.mxu0 0.0
        %1296 = vmatprep.subr.mxu0 0.0
        %1297 = vmatpush1.msra.mxu0 0.0
        %1298 = vmatprep.subr.mxu0 0.0
        %1299 = vmatpush1.msra.mxu0 0.0
        %1300 = vmatprep.subr.mxu0 0.0
        %1301 = vmatpush1.msra.mxu0 0.0
        %1302 = vmatprep.subr.mxu0 0.0
        %1303 = vmatpush1.msra.mxu0 0.0
        %1304 = vmatprep.subr.mxu0 0.0
        %1305 = vmatpush1.msra.mxu0 0.0
        %1306 = vmatprep.subr.mxu0 0.0
        %1307 = vmatpush1.msra.mxu0 0.0
        %1308 = vmatprep.subr.mxu0 0.0
        %1309 = vmatpush1.msra.mxu0 0.0
        %1310 = vmatprep.subr.mxu0 0.0
        %1311 = vmatpush1.msra.mxu0 0.0
        %1312 = vmatprep.subr.mxu0 0.0
        %1313 = vmatpush1.msra.mxu0 0.0
        %1314 = vmatprep.subr.mxu0 0.0
        %1315 = vmatpush1.msra.mxu0 0.0
        %1316 = vmatprep.subr.mxu0 0.0
        %1317 = vmatpush1.msra.mxu0 0.0
        %1318 = vmatprep.subr.mxu0 0.0
        %1319 = vmatpush1.msra.mxu0 0.0
        %1320 = vmatprep.subr.mxu0 0.0
        %1321 = vmatpush1.msra.mxu0 0.0
        %1322 = vmatprep.subr.mxu0 0.0
        %1323 = vmatpush1.msra.mxu0 0.0
        %1324 = vmatprep.subr.mxu0 0.0
        %1325 = vmatpush1.msra.mxu0 0.0
        %1326 = vmatprep.subr.mxu0 0.0
        %1327 = vmatpush1.msra.mxu0 0.0
        %1328 = vmatprep.subr.mxu0 0.0
        %1329 = vmatpush1.msra.mxu0 0.0
        %1330 = vmatprep.subr.mxu0 0.0
        %1331 = vmatpush1.msra.mxu0 0.0
        %1332 = vmatprep.subr.mxu0 0.0
        %1333 = vmatpush1.msra.mxu0 0.0
        %1334 = vmatprep.subr.mxu0 0.0
        %1335 = vmatpush1.msra.mxu0 0.0
        %1336 = vmatprep.subr.mxu0 0.0
        %1337 = vmatpush1.msra.mxu0 0.0
        %1338 = vmatprep.subr.mxu0 0.0
        %1339 = vmatpush1.msra.mxu0 0.0
        %1340 = vmatprep.subr.mxu0 0.0
        %1341 = vmatpush1.msra.mxu0 0.0
        %1342 = vmatprep.subr.mxu0 0.0
        %1343 = vmatpush1.msra.mxu0 0.0
        %1344 = vmatprep.mubr.f32.mxu0 0.0
        %1345 = vmatmul.mubr.f32.gmra.mrb[0].mxu0 %v1128
        %v1346 = vpop.f32.mrb[0].mxu0
        %v1347 = vadd.f32 0.0, %v1346
        %v1348 = vpop.f32.mrb[0].mxu0
        %1349 = vdwg.mxu0
        %v1351 = vsel %vm1130, %v1065, 0
        %1353 = vmatprep.subr.mxu0 0.0
        %1354 = vmatpush1.msra.mxu0 %v1061
        %1355 = vmatprep.subr.mxu0 0.0
        %1356 = vmatpush1.msra.mxu0 %v1062
        %1357 = vmatprep.subr.mxu0 0.0
        %1358 = vmatpush1.msra.mxu0 %v1063
        %1359 = vmatprep.subr.mxu0 0.0
        %1360 = vmatpush1.msra.mxu0 %v1064
        %1361 = vmatprep.subr.mxu0 0.0
        %1362 = vmatpush1.msra.mxu0 %v1351
        %1363 = vmatprep.subr.mxu0 0.0
        %1364 = vmatpush1.msra.mxu0 0.0
        %1365 = vmatprep.subr.mxu0 0.0
        %1366 = vmatpush1.msra.mxu0 0.0
        %1367 = vmatprep.subr.mxu0 0.0
        %1368 = vmatpush1.msra.mxu0 0.0
        %1369 = vmatprep.subr.mxu0 0.0
        %1370 = vmatpush1.msra.mxu0 0.0
        %1371 = vmatprep.subr.mxu0 0.0
        %1372 = vmatpush1.msra.mxu0 0.0
        %1373 = vmatprep.subr.mxu0 0.0
        %1374 = vmatpush1.msra.mxu0 0.0
        %1375 = vmatprep.subr.mxu0 0.0
        %1376 = vmatpush1.msra.mxu0 0.0
        %1377 = vmatprep.subr.mxu0 0.0
        %1378 = vmatpush1.msra.mxu0 0.0
        %1379 = vmatprep.subr.mxu0 0.0
        %1380 = vmatpush1.msra.mxu0 0.0
        %1381 = vmatprep.subr.mxu0 0.0
        %1382 = vmatpush1.msra.mxu0 0.0
        %1383 = vmatprep.subr.mxu0 0.0
        %1384 = vmatpush1.msra.mxu0 0.0
        %1385 = vmatprep.subr.mxu0 0.0
        %1386 = vmatpush1.msra.mxu0 0.0
        %1387 = vmatprep.subr.mxu0 0.0
        %1388 = vmatpush1.msra.mxu0 0.0
        %1389 = vmatprep.subr.mxu0 0.0
        %1390 = vmatpush1.msra.mxu0 0.0
        %1391 = vmatprep.subr.mxu0 0.0
        %1392 = vmatpush1.msra.mxu0 0.0
        %1393 = vmatprep.subr.mxu0 0.0
        %1394 = vmatpush1.msra.mxu0 0.0
        %1395 = vmatprep.subr.mxu0 0.0
        %1396 = vmatpush1.msra.mxu0 0.0
        %1397 = vmatprep.subr.mxu0 0.0
        %1398 = vmatpush1.msra.mxu0 0.0
        %1399 = vmatprep.subr.mxu0 0.0
        %1400 = vmatpush1.msra.mxu0 0.0
        %1401 = vmatprep.subr.mxu0 0.0
        %1402 = vmatpush1.msra.mxu0 0.0
        %1403 = vmatprep.subr.mxu0 0.0
        %1404 = vmatpush1.msra.mxu0 0.0
        %1405 = vmatprep.subr.mxu0 0.0
        %1406 = vmatpush1.msra.mxu0 0.0
        %1407 = vmatprep.subr.mxu0 0.0
        %1408 = vmatpush1.msra.mxu0 0.0
        %1409 = vmatprep.subr.mxu0 0.0
        %1410 = vmatpush1.msra.mxu0 0.0
        %1411 = vmatprep.subr.mxu0 0.0
        %1412 = vmatpush1.msra.mxu0 0.0
        %1413 = vmatprep.subr.mxu0 0.0
        %1414 = vmatpush1.msra.mxu0 0.0
        %1415 = vmatprep.subr.mxu0 0.0
        %1416 = vmatpush1.msra.mxu0 0.0
        %1417 = vmatprep.mubr.f32.mxu0 0.0
        %1418 = vmatmul.mubr.f32.gmra.mrb[0].mxu0 %v1128
        %v1419 = vpop.f32.mrb[0].mxu0
        %v1420 = vadd.f32 0.0, %v1419
        %v1421 = vpop.f32.mrb[0].mxu0
        %1422 = vdwg.mxu0
        %v1424 = vsel %vm1130, %v1070, 0
        %1426 = vmatprep.subr.mxu0 0.0
        %1427 = vmatpush1.msra.mxu0 %v1066
        %1428 = vmatprep.subr.mxu0 0.0
        %1429 = vmatpush1.msra.mxu0 %v1067
        %1430 = vmatprep.subr.mxu0 0.0
        %1431 = vmatpush1.msra.mxu0 %v1068
        %1432 = vmatprep.subr.mxu0 0.0
        %1433 = vmatpush1.msra.mxu0 %v1069
        %1434 = vmatprep.subr.mxu0 0.0
        %1435 = vmatpush1.msra.mxu0 %v1424
        %1436 = vmatprep.subr.mxu0 0.0
        %1437 = vmatpush1.msra.mxu0 0.0
        %1438 = vmatprep.subr.mxu0 0.0
        %1439 = vmatpush1.msra.mxu0 0.0
        %1440 = vmatprep.subr.mxu0 0.0
        %1441 = vmatpush1.msra.mxu0 0.0
        %1442 = vmatprep.subr.mxu0 0.0
        %1443 = vmatpush1.msra.mxu0 0.0
        %1444 = vmatprep.subr.mxu0 0.0
        %1445 = vmatpush1.msra.mxu0 0.0
        %1446 = vmatprep.subr.mxu0 0.0
        %1447 = vmatpush1.msra.mxu0 0.0
        %1448 = vmatprep.subr.mxu0 0.0
        %1449 = vmatpush1.msra.mxu0 0.0
        %1450 = vmatprep.subr.mxu0 0.0
        %1451 = vmatpush1.msra.mxu0 0.0
        %1452 = vmatprep.subr.mxu0 0.0
        %1453 = vmatpush1.msra.mxu0 0.0
        %1454 = vmatprep.subr.mxu0 0.0
        %1455 = vmatpush1.msra.mxu0 0.0
        %1456 = vmatprep.subr.mxu0 0.0
        %1457 = vmatpush1.msra.mxu0 0.0
        %1458 = vmatprep.subr.mxu0 0.0
        %1459 = vmatpush1.msra.mxu0 0.0
        %1460 = vmatprep.subr.mxu0 0.0
        %1461 = vmatpush1.msra.mxu0 0.0
        %1462 = vmatprep.subr.mxu0 0.0
        %1463 = vmatpush1.msra.mxu0 0.0
        %1464 = vmatprep.subr.mxu0 0.0
        %1465 = vmatpush1.msra.mxu0 0.0
        %1466 = vmatprep.subr.mxu0 0.0
        %1467 = vmatpush1.msra.mxu0 0.0
        %1468 = vmatprep.subr.mxu0 0.0
        %1469 = vmatpush1.msra.mxu0 0.0
        %1470 = vmatprep.subr.mxu0 0.0
        %1471 = vmatpush1.msra.mxu0 0.0
        %1472 = vmatprep.subr.mxu0 0.0
        %1473 = vmatpush1.msra.mxu0 0.0
        %1474 = vmatprep.subr.mxu0 0.0
        %1475 = vmatpush1.msra.mxu0 0.0
        %1476 = vmatprep.subr.mxu0 0.0
        %1477 = vmatpush1.msra.mxu0 0.0
        %1478 = vmatprep.subr.mxu0 0.0
        %1479 = vmatpush1.msra.mxu0 0.0
        %1480 = vmatprep.subr.mxu0 0.0
        %1481 = vmatpush1.msra.mxu0 0.0
        %1482 = vmatprep.subr.mxu0 0.0
        %1483 = vmatpush1.msra.mxu0 0.0
        %1484 = vmatprep.subr.mxu0 0.0
        %1485 = vmatpush1.msra.mxu0 0.0
        %1486 = vmatprep.subr.mxu0 0.0
        %1487 = vmatpush1.msra.mxu0 0.0
        %1488 = vmatprep.subr.mxu0 0.0
        %1489 = vmatpush1.msra.mxu0 0.0
        %1490 = vmatprep.mubr.f32.mxu0 0.0
        %1491 = vmatmul.mubr.f32.gmra.mrb[0].mxu0 %v1128
        %v1492 = vpop.f32.mrb[0].mxu0
        %v1493 = vadd.f32 0.0, %v1492
        %v1494 = vpop.f32.mrb[0].mxu0
        %1495 = vdwg.mxu0
        %v1497 = vsel %vm1130, %v1075, 0
        %1499 = vmatprep.subr.mxu0 0.0
        %1500 = vmatpush1.msra.mxu0 %v1071
        %1501 = vmatprep.subr.mxu0 0.0
        %1502 = vmatpush1.msra.mxu0 %v1072
        %1503 = vmatprep.subr.mxu0 0.0
        %1504 = vmatpush1.msra.mxu0 %v1073
        %1505 = vmatprep.subr.mxu0 0.0
        %1506 = vmatpush1.msra.mxu0 %v1074
        %1507 = vmatprep.subr.mxu0 0.0
        %1508 = vmatpush1.msra.mxu0 %v1497
        %1509 = vmatprep.subr.mxu0 0.0
        %1510 = vmatpush1.msra.mxu0 0.0
        %1511 = vmatprep.subr.mxu0 0.0
        %1512 = vmatpush1.msra.mxu0 0.0
        %1513 = vmatprep.subr.mxu0 0.0
        %1514 = vmatpush1.msra.mxu0 0.0
        %1515 = vmatprep.subr.mxu0 0.0
        %1516 = vmatpush1.msra.mxu0 0.0
        %1517 = vmatprep.subr.mxu0 0.0
        %1518 = vmatpush1.msra.mxu0 0.0
        %1519 = vmatprep.subr.mxu0 0.0
        %1520 = vmatpush1.msra.mxu0 0.0
        %1521 = vmatprep.subr.mxu0 0.0
        %1522 = vmatpush1.msra.mxu0 0.0
        %1523 = vmatprep.subr.mxu0 0.0
        %1524 = vmatpush1.msra.mxu0 0.0
        %1525 = vmatprep.subr.mxu0 0.0
        %1526 = vmatpush1.msra.mxu0 0.0
        %1527 = vmatprep.subr.mxu0 0.0
        %1528 = vmatpush1.msra.mxu0 0.0
        %1529 = vmatprep.subr.mxu0 0.0
        %1530 = vmatpush1.msra.mxu0 0.0
        %1531 = vmatprep.subr.mxu0 0.0
        %1532 = vmatpush1.msra.mxu0 0.0
        %1533 = vmatprep.subr.mxu0 0.0
        %1534 = vmatpush1.msra.mxu0 0.0
        %1535 = vmatprep.subr.mxu0 0.0
        %1536 = vmatpush1.msra.mxu0 0.0
        %1537 = vmatprep.subr.mxu0 0.0
        %1538 = vmatpush1.msra.mxu0 0.0
        %1539 = vmatprep.subr.mxu0 0.0
        %1540 = vmatpush1.msra.mxu0 0.0
        %1541 = vmatprep.subr.mxu0 0.0
        %1542 = vmatpush1.msra.mxu0 0.0
        %1543 = vmatprep.subr.mxu0 0.0
        %1544 = vmatpush1.msra.mxu0 0.0
        %1545 = vmatprep.subr.mxu0 0.0
        %1546 = vmatpush1.msra.mxu0 0.0
        %1547 = vmatprep.subr.mxu0 0.0
        %1548 = vmatpush1.msra.mxu0 0.0
        %1549 = vmatprep.subr.mxu0 0.0
        %1550 = vmatpush1.msra.mxu0 0.0
        %1551 = vmatprep.subr.mxu0 0.0
        %1552 = vmatpush1.msra.mxu0 0.0
        %1553 = vmatprep.subr.mxu0 0.0
        %1554 = vmatpush1.msra.mxu0 0.0
        %1555 = vmatprep.subr.mxu0 0.0
        %1556 = vmatpush1.msra.mxu0 0.0
        %1557 = vmatprep.subr.mxu0 0.0
        %1558 = vmatpush1.msra.mxu0 0.0
        %1559 = vmatprep.subr.mxu0 0.0
        %1560 = vmatpush1.msra.mxu0 0.0
        %1561 = vmatprep.subr.mxu0 0.0
        %1562 = vmatpush1.msra.mxu0 0.0
        %1563 = vmatprep.mubr.f32.mxu0 0.0
        %1564 = vmatmul.mubr.f32.gmra.mrb[0].mxu0 %v1128
        %v1565 = vpop.f32.mrb[0].mxu0
        %v1566 = vadd.f32 0.0, %v1565
        %v1567 = vpop.f32.mrb[0].mxu0
        %1568 = vdwg.mxu0
        %v1570 = vsel %vm1130, %v1080, 0
        %1572 = vmatprep.subr.mxu0 0.0
        %1573 = vmatpush1.msra.mxu0 %v1076
        %1574 = vmatprep.subr.mxu0 0.0
        %1575 = vmatpush1.msra.mxu0 %v1077
        %1576 = vmatprep.subr.mxu0 0.0
        %1577 = vmatpush1.msra.mxu0 %v1078
        %1578 = vmatprep.subr.mxu0 0.0
        %1579 = vmatpush1.msra.mxu0 %v1079
        %1580 = vmatprep.subr.mxu0 0.0
        %1581 = vmatpush1.msra.mxu0 %v1570
        %1582 = vmatprep.subr.mxu0 0.0
        %1583 = vmatpush1.msra.mxu0 0.0
        %1584 = vmatprep.subr.mxu0 0.0
        %1585 = vmatpush1.msra.mxu0 0.0
        %1586 = vmatprep.subr.mxu0 0.0
        %1587 = vmatpush1.msra.mxu0 0.0
        %1588 = vmatprep.subr.mxu0 0.0
        %1589 = vmatpush1.msra.mxu0 0.0
        %1590 = vmatprep.subr.mxu0 0.0
        %1591 = vmatpush1.msra.mxu0 0.0
        %1592 = vmatprep.subr.mxu0 0.0
        %1593 = vmatpush1.msra.mxu0 0.0
        %1594 = vmatprep.subr.mxu0 0.0
        %1595 = vmatpush1.msra.mxu0 0.0
        %1596 = vmatprep.subr.mxu0 0.0
        %1597 = vmatpush1.msra.mxu0 0.0
        %1598 = vmatprep.subr.mxu0 0.0
        %1599 = vmatpush1.msra.mxu0 0.0
        %1600 = vmatprep.subr.mxu0 0.0
        %1601 = vmatpush1.msra.mxu0 0.0
        %1602 = vmatprep.subr.mxu0 0.0
        %1603 = vmatpush1.msra.mxu0 0.0
        %1604 = vmatprep.subr.mxu0 0.0
        %1605 = vmatpush1.msra.mxu0 0.0
        %1606 = vmatprep.subr.mxu0 0.0
        %1607 = vmatpush1.msra.mxu0 0.0
        %1608 = vmatprep.subr.mxu0 0.0
        %1609 = vmatpush1.msra.mxu0 0.0
        %1610 = vmatprep.subr.mxu0 0.0
        %1611 = vmatpush1.msra.mxu0 0.0
        %1612 = vmatprep.subr.mxu0 0.0
        %1613 = vmatpush1.msra.mxu0 0.0
        %1614 = vmatprep.subr.mxu0 0.0
        %1615 = vmatpush1.msra.mxu0 0.0
        %1616 = vmatprep.subr.mxu0 0.0
        %1617 = vmatpush1.msra.mxu0 0.0
        %1618 = vmatprep.subr.mxu0 0.0
        %1619 = vmatpush1.msra.mxu0 0.0
        %1620 = vmatprep.subr.mxu0 0.0
        %1621 = vmatpush1.msra.mxu0 0.0
        %1622 = vmatprep.subr.mxu0 0.0
        %1623 = vmatpush1.msra.mxu0 0.0
        %1624 = vmatprep.subr.mxu0 0.0
        %1625 = vmatpush1.msra.mxu0 0.0
        %1626 = vmatprep.subr.mxu0 0.0
        %1627 = vmatpush1.msra.mxu0 0.0
        %1628 = vmatprep.subr.mxu0 0.0
        %1629 = vmatpush1.msra.mxu0 0.0
        %1630 = vmatprep.subr.mxu0 0.0
        %1631 = vmatpush1.msra.mxu0 0.0
        %1632 = vmatprep.subr.mxu0 0.0
        %1633 = vmatpush1.msra.mxu0 0.0
        %1634 = vmatprep.subr.mxu0 0.0
        %1635 = vmatpush1.msra.mxu0 0.0
        %1636 = vmatprep.mubr.f32.mxu0 0.0
        %1637 = vmatmul.mubr.f32.gmra.mrb[0].mxu0 %v1128
        %v1638 = vpop.f32.mrb[0].mxu0
        %v1639 = vadd.f32 0.0, %v1638
        %v1640 = vpop.f32.mrb[0].mxu0
        %1641 = vdwg.mxu0
        %v1643 = vsel %vm1130, %v1085, 0
        %1645 = vmatprep.subr.mxu0 0.0
        %1646 = vmatpush1.msra.mxu0 %v1081
        %1647 = vmatprep.subr.mxu0 0.0
        %1648 = vmatpush1.msra.mxu0 %v1082
        %1649 = vmatprep.subr.mxu0 0.0
        %1650 = vmatpush1.msra.mxu0 %v1083
        %1651 = vmatprep.subr.mxu0 0.0
        %1652 = vmatpush1.msra.mxu0 %v1084
        %1653 = vmatprep.subr.mxu0 0.0
        %1654 = vmatpush1.msra.mxu0 %v1643
        %1655 = vmatprep.subr.mxu0 0.0
        %1656 = vmatpush1.msra.mxu0 0.0
        %1657 = vmatprep.subr.mxu0 0.0
        %1658 = vmatpush1.msra.mxu0 0.0
        %1659 = vmatprep.subr.mxu0 0.0
        %1660 = vmatpush1.msra.mxu0 0.0
        %1661 = vmatprep.subr.mxu0 0.0
        %1662 = vmatpush1.msra.mxu0 0.0
        %1663 = vmatprep.subr.mxu0 0.0
        %1664 = vmatpush1.msra.mxu0 0.0
        %1665 = vmatprep.subr.mxu0 0.0
        %1666 = vmatpush1.msra.mxu0 0.0
        %1667 = vmatprep.subr.mxu0 0.0
        %1668 = vmatpush1.msra.mxu0 0.0
        %1669 = vmatprep.subr.mxu0 0.0
        %1670 = vmatpush1.msra.mxu0 0.0
        %1671 = vmatprep.subr.mxu0 0.0
        %1672 = vmatpush1.msra.mxu0 0.0
        %1673 = vmatprep.subr.mxu0 0.0
        %1674 = vmatpush1.msra.mxu0 0.0
        %1675 = vmatprep.subr.mxu0 0.0
        %1676 = vmatpush1.msra.mxu0 0.0
        %1677 = vmatprep.subr.mxu0 0.0
        %1678 = vmatpush1.msra.mxu0 0.0
        %1679 = vmatprep.subr.mxu0 0.0
        %1680 = vmatpush1.msra.mxu0 0.0
        %1681 = vmatprep.subr.mxu0 0.0
        %1682 = vmatpush1.msra.mxu0 0.0
        %1683 = vmatprep.subr.mxu0 0.0
        %1684 = vmatpush1.msra.mxu0 0.0
        %1685 = vmatprep.subr.mxu0 0.0
        %1686 = vmatpush1.msra.mxu0 0.0
        %1687 = vmatprep.subr.mxu0 0.0
        %1688 = vmatpush1.msra.mxu0 0.0
        %1689 = vmatprep.subr.mxu0 0.0
        %1690 = vmatpush1.msra.mxu0 0.0
        %1691 = vmatprep.subr.mxu0 0.0
        %1692 = vmatpush1.msra.mxu0 0.0
        %1693 = vmatprep.subr.mxu0 0.0
        %1694 = vmatpush1.msra.mxu0 0.0
        %1695 = vmatprep.subr.mxu0 0.0
        %1696 = vmatpush1.msra.mxu0 0.0
        %1697 = vmatprep.subr.mxu0 0.0
        %1698 = vmatpush1.msra.mxu0 0.0
        %1699 = vmatprep.subr.mxu0 0.0
        %1700 = vmatpush1.msra.mxu0 0.0
        %1701 = vmatprep.subr.mxu0 0.0
        %1702 = vmatpush1.msra.mxu0 0.0
        %1703 = vmatprep.subr.mxu0 0.0
        %1704 = vmatpush1.msra.mxu0 0.0
        %1705 = vmatprep.subr.mxu0 0.0
        %1706 = vmatpush1.msra.mxu0 0.0
        %1707 = vmatprep.subr.mxu0 0.0
        %1708 = vmatpush1.msra.mxu0 0.0
        %1709 = vmatprep.mubr.f32.mxu0 0.0
        %1710 = vmatmul.mubr.f32.gmra.mrb[0].mxu0 %v1128
        %v1711 = vpop.f32.mrb[0].mxu0
        %v1712 = vadd.f32 0.0, %v1711
        %v1713 = vpop.f32.mrb[0].mxu0
        %1714 = vdwg.mxu0
        %v1716 = vsel %vm1130, %v1090, 0
        %1718 = vmatprep.subr.mxu0 0.0
        %1719 = vmatpush1.msra.mxu0 %v1086
        %1720 = vmatprep.subr.mxu0 0.0
        %1721 = vmatpush1.msra.mxu0 %v1087
        %1722 = vmatprep.subr.mxu0 0.0
        %1723 = vmatpush1.msra.mxu0 %v1088
        %1724 = vmatprep.subr.mxu0 0.0
        %1725 = vmatpush1.msra.mxu0 %v1089
        %1726 = vmatprep.subr.mxu0 0.0
        %1727 = vmatpush1.msra.mxu0 %v1716
        %1728 = vmatprep.subr.mxu0 0.0
        %1729 = vmatpush1.msra.mxu0 0.0
        %1730 = vmatprep.subr.mxu0 0.0
        %1731 = vmatpush1.msra.mxu0 0.0
        %1732 = vmatprep.subr.mxu0 0.0
        %1733 = vmatpush1.msra.mxu0 0.0
        %1734 = vmatprep.subr.mxu0 0.0
        %1735 = vmatpush1.msra.mxu0 0.0
        %1736 = vmatprep.subr.mxu0 0.0
        %1737 = vmatpush1.msra.mxu0 0.0
        %1738 = vmatprep.subr.mxu0 0.0
        %1739 = vmatpush1.msra.mxu0 0.0
        %1740 = vmatprep.subr.mxu0 0.0
        %1741 = vmatpush1.msra.mxu0 0.0
        %1742 = vmatprep.subr.mxu0 0.0
        %1743 = vmatpush1.msra.mxu0 0.0
        %1744 = vmatprep.subr.mxu0 0.0
        %1745 = vmatpush1.msra.mxu0 0.0
        %1746 = vmatprep.subr.mxu0 0.0
        %1747 = vmatpush1.msra.mxu0 0.0
        %1748 = vmatprep.subr.mxu0 0.0
        %1749 = vmatpush1.msra.mxu0 0.0
        %1750 = vmatprep.subr.mxu0 0.0
        %1751 = vmatpush1.msra.mxu0 0.0
        %1752 = vmatprep.subr.mxu0 0.0
        %1753 = vmatpush1.msra.mxu0 0.0
        %1754 = vmatprep.subr.mxu0 0.0
        %1755 = vmatpush1.msra.mxu0 0.0
        %1756 = vmatprep.subr.mxu0 0.0
        %1757 = vmatpush1.msra.mxu0 0.0
        %1758 = vmatprep.subr.mxu0 0.0
        %1759 = vmatpush1.msra.mxu0 0.0
        %1760 = vmatprep.subr.mxu0 0.0
        %1761 = vmatpush1.msra.mxu0 0.0
        %1762 = vmatprep.subr.mxu0 0.0
        %1763 = vmatpush1.msra.mxu0 0.0
        %1764 = vmatprep.subr.mxu0 0.0
        %1765 = vmatpush1.msra.mxu0 0.0
        %1766 = vmatprep.subr.mxu0 0.0
        %1767 = vmatpush1.msra.mxu0 0.0
        %1768 = vmatprep.subr.mxu0 0.0
        %1769 = vmatpush1.msra.mxu0 0.0
        %1770 = vmatprep.subr.mxu0 0.0
        %1771 = vmatpush1.msra.mxu0 0.0
        %1772 = vmatprep.subr.mxu0 0.0
        %1773 = vmatpush1.msra.mxu0 0.0
        %1774 = vmatprep.subr.mxu0 0.0
        %1775 = vmatpush1.msra.mxu0 0.0
        %1776 = vmatprep.subr.mxu0 0.0
        %1777 = vmatpush1.msra.mxu0 0.0
        %1778 = vmatprep.subr.mxu0 0.0
        %1779 = vmatpush1.msra.mxu0 0.0
        %1780 = vmatprep.subr.mxu0 0.0
        %1781 = vmatpush1.msra.mxu0 0.0
        %1782 = vmatprep.mubr.f32.mxu0 0.0
        %1783 = vmatmul.mubr.f32.gmra.mrb[0].mxu0 %v1128
        %v1784 = vpop.f32.mrb[0].mxu0
        %v1785 = vadd.f32 0.0, %v1784
        %v1786 = vpop.f32.mrb[0].mxu0
        %1787 = vdwg.mxu0
        %v1789 = vsel %vm1130, %v1095, 0
        %1791 = vmatprep.subr.mxu0 0.0
        %1792 = vmatpush1.msra.mxu0 %v1091
        %1793 = vmatprep.subr.mxu0 0.0
        %1794 = vmatpush1.msra.mxu0 %v1092
        %1795 = vmatprep.subr.mxu0 0.0
        %1796 = vmatpush1.msra.mxu0 %v1093
        %1797 = vmatprep.subr.mxu0 0.0
        %1798 = vmatpush1.msra.mxu0 %v1094
        %1799 = vmatprep.subr.mxu0 0.0
        %1800 = vmatpush1.msra.mxu0 %v1789
        %1801 = vmatprep.subr.mxu0 0.0
        %1802 = vmatpush1.msra.mxu0 0.0
        %1803 = vmatprep.subr.mxu0 0.0
        %1804 = vmatpush1.msra.mxu0 0.0
        %1805 = vmatprep.subr.mxu0 0.0
        %1806 = vmatpush1.msra.mxu0 0.0
        %1807 = vmatprep.subr.mxu0 0.0
        %1808 = vmatpush1.msra.mxu0 0.0
        %1809 = vmatprep.subr.mxu0 0.0
        %1810 = vmatpush1.msra.mxu0 0.0
        %1811 = vmatprep.subr.mxu0 0.0
        %1812 = vmatpush1.msra.mxu0 0.0
        %1813 = vmatprep.subr.mxu0 0.0
        %1814 = vmatpush1.msra.mxu0 0.0
        %1815 = vmatprep.subr.mxu0 0.0
        %1816 = vmatpush1.msra.mxu0 0.0
        %1817 = vmatprep.subr.mxu0 0.0
        %1818 = vmatpush1.msra.mxu0 0.0
        %1819 = vmatprep.subr.mxu0 0.0
        %1820 = vmatpush1.msra.mxu0 0.0
        %1821 = vmatprep.subr.mxu0 0.0
        %1822 = vmatpush1.msra.mxu0 0.0
        %1823 = vmatprep.subr.mxu0 0.0
        %1824 = vmatpush1.msra.mxu0 0.0
        %1825 = vmatprep.subr.mxu0 0.0
        %1826 = vmatpush1.msra.mxu0 0.0
        %1827 = vmatprep.subr.mxu0 0.0
        %1828 = vmatpush1.msra.mxu0 0.0
        %1829 = vmatprep.subr.mxu0 0.0
        %1830 = vmatpush1.msra.mxu0 0.0
        %1831 = vmatprep.subr.mxu0 0.0
        %1832 = vmatpush1.msra.mxu0 0.0
        %1833 = vmatprep.subr.mxu0 0.0
        %1834 = vmatpush1.msra.mxu0 0.0
        %1835 = vmatprep.subr.mxu0 0.0
        %1836 = vmatpush1.msra.mxu0 0.0
        %1837 = vmatprep.subr.mxu0 0.0
        %1838 = vmatpush1.msra.mxu0 0.0
        %1839 = vmatprep.subr.mxu0 0.0
        %1840 = vmatpush1.msra.mxu0 0.0
        %1841 = vmatprep.subr.mxu0 0.0
        %1842 = vmatpush1.msra.mxu0 0.0
        %1843 = vmatprep.subr.mxu0 0.0
        %1844 = vmatpush1.msra.mxu0 0.0
        %1845 = vmatprep.subr.mxu0 0.0
        %1846 = vmatpush1.msra.mxu0 0.0
        %1847 = vmatprep.subr.mxu0 0.0
        %1848 = vmatpush1.msra.mxu0 0.0
        %1849 = vmatprep.subr.mxu0 0.0
        %1850 = vmatpush1.msra.mxu0 0.0
        %1851 = vmatprep.subr.mxu0 0.0
        %1852 = vmatpush1.msra.mxu0 0.0
        %1853 = vmatprep.subr.mxu0 0.0
        %1854 = vmatpush1.msra.mxu0 0.0
        %1855 = vmatprep.mubr.f32.mxu0 0.0
        %1856 = vmatmul.mubr.f32.gmra.mrb[0].mxu0 %v1128
        %v1857 = vpop.f32.mrb[0].mxu0
        %v1858 = vadd.f32 0.0, %v1857
        %v1859 = vpop.f32.mrb[0].mxu0
        %1860 = vdwg.mxu0
        %v1862 = vsel %vm1130, %v1100, 0
        %1864 = vmatprep.subr.mxu0 0.0
        %1865 = vmatpush1.msra.mxu0 %v1096
        %1866 = vmatprep.subr.mxu0 0.0
        %1867 = vmatpush1.msra.mxu0 %v1097
        %1868 = vmatprep.subr.mxu0 0.0
        %1869 = vmatpush1.msra.mxu0 %v1098
        %1870 = vmatprep.subr.mxu0 0.0
        %1871 = vmatpush1.msra.mxu0 %v1099
        %1872 = vmatprep.subr.mxu0 0.0
        %1873 = vmatpush1.msra.mxu0 %v1862
        %1874 = vmatprep.subr.mxu0 0.0
        %1875 = vmatpush1.msra.mxu0 0.0
        %1876 = vmatprep.subr.mxu0 0.0
        %1877 = vmatpush1.msra.mxu0 0.0
        %1878 = vmatprep.subr.mxu0 0.0
        %1879 = vmatpush1.msra.mxu0 0.0
        %1880 = vmatprep.subr.mxu0 0.0
        %1881 = vmatpush1.msra.mxu0 0.0
        %1882 = vmatprep.subr.mxu0 0.0
        %1883 = vmatpush1.msra.mxu0 0.0
        %1884 = vmatprep.subr.mxu0 0.0
        %1885 = vmatpush1.msra.mxu0 0.0
        %1886 = vmatprep.subr.mxu0 0.0
        %1887 = vmatpush1.msra.mxu0 0.0
        %1888 = vmatprep.subr.mxu0 0.0
        %1889 = vmatpush1.msra.mxu0 0.0
        %1890 = vmatprep.subr.mxu0 0.0
        %1891 = vmatpush1.msra.mxu0 0.0
        %1892 = vmatprep.subr.mxu0 0.0
        %1893 = vmatpush1.msra.mxu0 0.0
        %1894 = vmatprep.subr.mxu0 0.0
        %1895 = vmatpush1.msra.mxu0 0.0
        %1896 = vmatprep.subr.mxu0 0.0
        %1897 = vmatpush1.msra.mxu0 0.0
        %1898 = vmatprep.subr.mxu0 0.0
        %1899 = vmatpush1.msra.mxu0 0.0
        %1900 = vmatprep.subr.mxu0 0.0
        %1901 = vmatpush1.msra.mxu0 0.0
        %1902 = vmatprep.subr.mxu0 0.0
        %1903 = vmatpush1.msra.mxu0 0.0
        %1904 = vmatprep.subr.mxu0 0.0
        %1905 = vmatpush1.msra.mxu0 0.0
        %1906 = vmatprep.subr.mxu0 0.0
        %1907 = vmatpush1.msra.mxu0 0.0
        %1908 = vmatprep.subr.mxu0 0.0
        %1909 = vmatpush1.msra.mxu0 0.0
        %1910 = vmatprep.subr.mxu0 0.0
        %1911 = vmatpush1.msra.mxu0 0.0
        %1912 = vmatprep.subr.mxu0 0.0
        %1913 = vmatpush1.msra.mxu0 0.0
        %1914 = vmatprep.subr.mxu0 0.0
        %1915 = vmatpush1.msra.mxu0 0.0
        %1916 = vmatprep.subr.mxu0 0.0
        %1917 = vmatpush1.msra.mxu0 0.0
        %1918 = vmatprep.subr.mxu0 0.0
        %1919 = vmatpush1.msra.mxu0 0.0
        %1920 = vmatprep.subr.mxu0 0.0
        %1921 = vmatpush1.msra.mxu0 0.0
        %1922 = vmatprep.subr.mxu0 0.0
        %1923 = vmatpush1.msra.mxu0 0.0
        %1924 = vmatprep.subr.mxu0 0.0
        %1925 = vmatpush1.msra.mxu0 0.0
        %1926 = vmatprep.subr.mxu0 0.0
        %1927 = vmatpush1.msra.mxu0 0.0
        %1928 = vmatprep.mubr.f32.mxu0 0.0
        %1929 = vmatmul.mubr.f32.gmra.mrb[0].mxu0 %v1128
        %v1930 = vpop.f32.mrb[0].mxu0
        %v1931 = vadd.f32 0.0, %v1930
        %v1932 = vpop.f32.mrb[0].mxu0
        %1933 = vdwg.mxu0
        %v1935 = vsel %vm1130, %v1105, 0
        %1937 = vmatprep.subr.mxu0 0.0
        %1938 = vmatpush1.msra.mxu0 %v1101
        %1939 = vmatprep.subr.mxu0 0.0
        %1940 = vmatpush1.msra.mxu0 %v1102
        %1941 = vmatprep.subr.mxu0 0.0
        %1942 = vmatpush1.msra.mxu0 %v1103
        %1943 = vmatprep.subr.mxu0 0.0
        %1944 = vmatpush1.msra.mxu0 %v1104
        %1945 = vmatprep.subr.mxu0 0.0
        %1946 = vmatpush1.msra.mxu0 %v1935
        %1947 = vmatprep.subr.mxu0 0.0
        %1948 = vmatpush1.msra.mxu0 0.0
        %1949 = vmatprep.subr.mxu0 0.0
        %1950 = vmatpush1.msra.mxu0 0.0
        %1951 = vmatprep.subr.mxu0 0.0
        %1952 = vmatpush1.msra.mxu0 0.0
        %1953 = vmatprep.subr.mxu0 0.0
        %1954 = vmatpush1.msra.mxu0 0.0
        %1955 = vmatprep.subr.mxu0 0.0
        %1956 = vmatpush1.msra.mxu0 0.0
        %1957 = vmatprep.subr.mxu0 0.0
        %1958 = vmatpush1.msra.mxu0 0.0
        %1959 = vmatprep.subr.mxu0 0.0
        %1960 = vmatpush1.msra.mxu0 0.0
        %1961 = vmatprep.subr.mxu0 0.0
        %1962 = vmatpush1.msra.mxu0 0.0
        %1963 = vmatprep.subr.mxu0 0.0
        %1964 = vmatpush1.msra.mxu0 0.0
        %1965 = vmatprep.subr.mxu0 0.0
        %1966 = vmatpush1.msra.mxu0 0.0
        %1967 = vmatprep.subr.mxu0 0.0
        %1968 = vmatpush1.msra.mxu0 0.0
        %1969 = vmatprep.subr.mxu0 0.0
        %1970 = vmatpush1.msra.mxu0 0.0
        %1971 = vmatprep.subr.mxu0 0.0
        %1972 = vmatpush1.msra.mxu0 0.0
        %1973 = vmatprep.subr.mxu0 0.0
        %1974 = vmatpush1.msra.mxu0 0.0
        %1975 = vmatprep.subr.mxu0 0.0
        %1976 = vmatpush1.msra.mxu0 0.0
        %1977 = vmatprep.subr.mxu0 0.0
        %1978 = vmatpush1.msra.mxu0 0.0
        %1979 = vmatprep.subr.mxu0 0.0
        %1980 = vmatpush1.msra.mxu0 0.0
        %1981 = vmatprep.subr.mxu0 0.0
        %1982 = vmatpush1.msra.mxu0 0.0
        %1983 = vmatprep.subr.mxu0 0.0
        %1984 = vmatpush1.msra.mxu0 0.0
        %1985 = vmatprep.subr.mxu0 0.0
        %1986 = vmatpush1.msra.mxu0 0.0
        %1987 = vmatprep.subr.mxu0 0.0
        %1988 = vmatpush1.msra.mxu0 0.0
        %1989 = vmatprep.subr.mxu0 0.0
        %1990 = vmatpush1.msra.mxu0 0.0
        %1991 = vmatprep.subr.mxu0 0.0
        %1992 = vmatpush1.msra.mxu0 0.0
        %1993 = vmatprep.subr.mxu0 0.0
        %1994 = vmatpush1.msra.mxu0 0.0
        %1995 = vmatprep.subr.mxu0 0.0
        %1996 = vmatpush1.msra.mxu0 0.0
        %1997 = vmatprep.subr.mxu0 0.0
        %1998 = vmatpush1.msra.mxu0 0.0
        %1999 = vmatprep.subr.mxu0 0.0
        %2000 = vmatpush1.msra.mxu0 0.0
        %2001 = vmatprep.mubr.f32.mxu0 0.0
        %2002 = vmatmul.mubr.f32.gmra.mrb[0].mxu0 %v1128
        %v2003 = vpop.f32.mrb[0].mxu0
        %v2004 = vadd.f32 0.0, %v2003
        %v2005 = vpop.f32.mrb[0].mxu0
        %2006 = vdwg.mxu0
        %v2008 = vsel %vm1130, %v1110, 0
        %2010 = vmatprep.subr.mxu0 0.0
        %2011 = vmatpush1.msra.mxu0 %v1106
        %2012 = vmatprep.subr.mxu0 0.0
        %2013 = vmatpush1.msra.mxu0 %v1107
        %2014 = vmatprep.subr.mxu0 0.0
        %2015 = vmatpush1.msra.mxu0 %v1108
        %2016 = vmatprep.subr.mxu0 0.0
        %2017 = vmatpush1.msra.mxu0 %v1109
        %2018 = vmatprep.subr.mxu0 0.0
        %2019 = vmatpush1.msra.mxu0 %v2008
        %2020 = vmatprep.subr.mxu0 0.0
        %2021 = vmatpush1.msra.mxu0 0.0
        %2022 = vmatprep.subr.mxu0 0.0
        %2023 = vmatpush1.msra.mxu0 0.0
        %2024 = vmatprep.subr.mxu0 0.0
        %2025 = vmatpush1.msra.mxu0 0.0
        %2026 = vmatprep.subr.mxu0 0.0
        %2027 = vmatpush1.msra.mxu0 0.0
        %2028 = vmatprep.subr.mxu0 0.0
        %2029 = vmatpush1.msra.mxu0 0.0
        %2030 = vmatprep.subr.mxu0 0.0
        %2031 = vmatpush1.msra.mxu0 0.0
        %2032 = vmatprep.subr.mxu0 0.0
        %2033 = vmatpush1.msra.mxu0 0.0
        %2034 = vmatprep.subr.mxu0 0.0
        %2035 = vmatpush1.msra.mxu0 0.0
        %2036 = vmatprep.subr.mxu0 0.0
        %2037 = vmatpush1.msra.mxu0 0.0
        %2038 = vmatprep.subr.mxu0 0.0
        %2039 = vmatpush1.msra.mxu0 0.0
        %2040 = vmatprep.subr.mxu0 0.0
        %2041 = vmatpush1.msra.mxu0 0.0
        %2042 = vmatprep.subr.mxu0 0.0
        %2043 = vmatpush1.msra.mxu0 0.0
        %2044 = vmatprep.subr.mxu0 0.0
        %2045 = vmatpush1.msra.mxu0 0.0
        %2046 = vmatprep.subr.mxu0 0.0
        %2047 = vmatpush1.msra.mxu0 0.0
        %2048 = vmatprep.subr.mxu0 0.0
        %2049 = vmatpush1.msra.mxu0 0.0
        %2050 = vmatprep.subr.mxu0 0.0
        %2051 = vmatpush1.msra.mxu0 0.0
        %2052 = vmatprep.subr.mxu0 0.0
        %2053 = vmatpush1.msra.mxu0 0.0
        %2054 = vmatprep.subr.mxu0 0.0
        %2055 = vmatpush1.msra.mxu0 0.0
        %2056 = vmatprep.subr.mxu0 0.0
        %2057 = vmatpush1.msra.mxu0 0.0
        %2058 = vmatprep.subr.mxu0 0.0
        %2059 = vmatpush1.msra.mxu0 0.0
        %2060 = vmatprep.subr.mxu0 0.0
        %2061 = vmatpush1.msra.mxu0 0.0
        %2062 = vmatprep.subr.mxu0 0.0
        %2063 = vmatpush1.msra.mxu0 0.0
        %2064 = vmatprep.subr.mxu0 0.0
        %2065 = vmatpush1.msra.mxu0 0.0
        %2066 = vmatprep.subr.mxu0 0.0
        %2067 = vmatpush1.msra.mxu0 0.0
        %2068 = vmatprep.subr.mxu0 0.0
        %2069 = vmatpush1.msra.mxu0 0.0
        %2070 = vmatprep.subr.mxu0 0.0
        %2071 = vmatpush1.msra.mxu0 0.0
        %2072 = vmatprep.subr.mxu0 0.0
        %2073 = vmatpush1.msra.mxu0 0.0
        %2074 = vmatprep.mubr.f32.mxu0 0.0
        %2075 = vmatmul.mubr.f32.gmra.mrb[0].mxu0 %v1128
        %v2076 = vpop.f32.mrb[0].mxu0
        %v2077 = vadd.f32 0.0, %v2076
        %v2078 = vpop.f32.mrb[0].mxu0
        %2079 = vdwg.mxu0
        %v2081 = vsel %vm1130, %v1115, 0
        %2083 = vmatprep.subr.mxu0 0.0
        %2084 = vmatpush1.msra.mxu0 %v1111
        %2085 = vmatprep.subr.mxu0 0.0
        %2086 = vmatpush1.msra.mxu0 %v1112
        %2087 = vmatprep.subr.mxu0 0.0
        %2088 = vmatpush1.msra.mxu0 %v1113
        %2089 = vmatprep.subr.mxu0 0.0
        %2090 = vmatpush1.msra.mxu0 %v1114
        %2091 = vmatprep.subr.mxu0 0.0
        %2092 = vmatpush1.msra.mxu0 %v2081
        %2093 = vmatprep.subr.mxu0 0.0
        %2094 = vmatpush1.msra.mxu0 0.0
        %2095 = vmatprep.subr.mxu0 0.0
        %2096 = vmatpush1.msra.mxu0 0.0
        %2097 = vmatprep.subr.mxu0 0.0
        %2098 = vmatpush1.msra.mxu0 0.0
        %2099 = vmatprep.subr.mxu0 0.0
        %2100 = vmatpush1.msra.mxu0 0.0
        %2101 = vmatprep.subr.mxu0 0.0
        %2102 = vmatpush1.msra.mxu0 0.0
        %2103 = vmatprep.subr.mxu0 0.0
        %2104 = vmatpush1.msra.mxu0 0.0
        %2105 = vmatprep.subr.mxu0 0.0
        %2106 = vmatpush1.msra.mxu0 0.0
        %2107 = vmatprep.subr.mxu0 0.0
        %2108 = vmatpush1.msra.mxu0 0.0
        %2109 = vmatprep.subr.mxu0 0.0
        %2110 = vmatpush1.msra.mxu0 0.0
        %2111 = vmatprep.subr.mxu0 0.0
        %2112 = vmatpush1.msra.mxu0 0.0
        %2113 = vmatprep.subr.mxu0 0.0
        %2114 = vmatpush1.msra.mxu0 0.0
        %2115 = vmatprep.subr.mxu0 0.0
        %2116 = vmatpush1.msra.mxu0 0.0
        %2117 = vmatprep.subr.mxu0 0.0
        %2118 = vmatpush1.msra.mxu0 0.0
        %2119 = vmatprep.subr.mxu0 0.0
        %2120 = vmatpush1.msra.mxu0 0.0
        %2121 = vmatprep.subr.mxu0 0.0
        %2122 = vmatpush1.msra.mxu0 0.0
        %2123 = vmatprep.subr.mxu0 0.0
        %2124 = vmatpush1.msra.mxu0 0.0
        %2125 = vmatprep.subr.mxu0 0.0
        %2126 = vmatpush1.msra.mxu0 0.0
        %2127 = vmatprep.subr.mxu0 0.0
        %2128 = vmatpush1.msra.mxu0 0.0
        %2129 = vmatprep.subr.mxu0 0.0
        %2130 = vmatpush1.msra.mxu0 0.0
        %2131 = vmatprep.subr.mxu0 0.0
        %2132 = vmatpush1.msra.mxu0 0.0
        %2133 = vmatprep.subr.mxu0 0.0
        %2134 = vmatpush1.msra.mxu0 0.0
        %2135 = vmatprep.subr.mxu0 0.0
        %2136 = vmatpush1.msra.mxu0 0.0
        %2137 = vmatprep.subr.mxu0 0.0
        %2138 = vmatpush1.msra.mxu0 0.0
        %2139 = vmatprep.subr.mxu0 0.0
        %2140 = vmatpush1.msra.mxu0 0.0
        %2141 = vmatprep.subr.mxu0 0.0
        %2142 = vmatpush1.msra.mxu0 0.0
        %2143 = vmatprep.subr.mxu0 0.0
        %2144 = vmatpush1.msra.mxu0 0.0
        %2145 = vmatprep.subr.mxu0 0.0
        %2146 = vmatpush1.msra.mxu0 0.0
        %2147 = vmatprep.mubr.f32.mxu0 0.0
        %2148 = vmatmul.mubr.f32.gmra.mrb[0].mxu0 %v1128
        %v2149 = vpop.f32.mrb[0].mxu0
        %v2150 = vadd.f32 0.0, %v2149
        %v2151 = vpop.f32.mrb[0].mxu0
        %2152 = vdwg.mxu0
        %v2154 = vsel %vm1130, %v1120, 0
        %2156 = vmatprep.subr.mxu0 0.0
        %2157 = vmatpush1.msra.mxu0 %v1116
        %2158 = vmatprep.subr.mxu0 0.0
        %2159 = vmatpush1.msra.mxu0 %v1117
        %2160 = vmatprep.subr.mxu0 0.0
        %2161 = vmatpush1.msra.mxu0 %v1118
        %2162 = vmatprep.subr.mxu0 0.0
        %2163 = vmatpush1.msra.mxu0 %v1119
        %2164 = vmatprep.subr.mxu0 0.0
        %2165 = vmatpush1.msra.mxu0 %v2154
        %2166 = vmatprep.subr.mxu0 0.0
        %2167 = vmatpush1.msra.mxu0 0.0
        %2168 = vmatprep.subr.mxu0 0.0
        %2169 = vmatpush1.msra.mxu0 0.0
        %2170 = vmatprep.subr.mxu0 0.0
        %2171 = vmatpush1.msra.mxu0 0.0
        %2172 = vmatprep.subr.mxu0 0.0
        %2173 = vmatpush1.msra.mxu0 0.0
        %2174 = vmatprep.subr.mxu0 0.0
        %2175 = vmatpush1.msra.mxu0 0.0
        %2176 = vmatprep.subr.mxu0 0.0
        %2177 = vmatpush1.msra.mxu0 0.0
        %2178 = vmatprep.subr.mxu0 0.0
        %2179 = vmatpush1.msra.mxu0 0.0
        %2180 = vmatprep.subr.mxu0 0.0
        %2181 = vmatpush1.msra.mxu0 0.0
        %2182 = vmatprep.subr.mxu0 0.0
        %2183 = vmatpush1.msra.mxu0 0.0
        %2184 = vmatprep.subr.mxu0 0.0
        %2185 = vmatpush1.msra.mxu0 0.0
        %2186 = vmatprep.subr.mxu0 0.0
        %2187 = vmatpush1.msra.mxu0 0.0
        %2188 = vmatprep.subr.mxu0 0.0
        %2189 = vmatpush1.msra.mxu0 0.0
        %2190 = vmatprep.subr.mxu0 0.0
        %2191 = vmatpush1.msra.mxu0 0.0
        %2192 = vmatprep.subr.mxu0 0.0
        %2193 = vmatpush1.msra.mxu0 0.0
        %2194 = vmatprep.subr.mxu0 0.0
        %2195 = vmatpush1.msra.mxu0 0.0
        %2196 = vmatprep.subr.mxu0 0.0
        %2197 = vmatpush1.msra.mxu0 0.0
        %2198 = vmatprep.subr.mxu0 0.0
        %2199 = vmatpush1.msra.mxu0 0.0
        %2200 = vmatprep.subr.mxu0 0.0
        %2201 = vmatpush1.msra.mxu0 0.0
        %2202 = vmatprep.subr.mxu0 0.0
        %2203 = vmatpush1.msra.mxu0 0.0
        %2204 = vmatprep.subr.mxu0 0.0
        %2205 = vmatpush1.msra.mxu0 0.0
        %2206 = vmatprep.subr.mxu0 0.0
        %2207 = vmatpush1.msra.mxu0 0.0
        %2208 = vmatprep.subr.mxu0 0.0
        %2209 = vmatpush1.msra.mxu0 0.0
        %2210 = vmatprep.subr.mxu0 0.0
        %2211 = vmatpush1.msra.mxu0 0.0
        %2212 = vmatprep.subr.mxu0 0.0
        %2213 = vmatpush1.msra.mxu0 0.0
        %2214 = vmatprep.subr.mxu0 0.0
        %2215 = vmatpush1.msra.mxu0 0.0
        %2216 = vmatprep.subr.mxu0 0.0
        %2217 = vmatpush1.msra.mxu0 0.0
        %2218 = vmatprep.subr.mxu0 0.0
        %2219 = vmatpush1.msra.mxu0 0.0
        %2220 = vmatprep.mubr.f32.mxu0 0.0
        %2221 = vmatmul.mubr.f32.gmra.mrb[0].mxu0 %v1128
        %v2222 = vpop.f32.mrb[0].mxu0
        %v2223 = vadd.f32 0.0, %v2222
        %v2224 = vpop.f32.mrb[0].mxu0
        %2225 = vdwg.mxu0
        %v2227 = vsel %vm1130, %v1125, 0
        %2229 = vmatprep.subr.mxu0 0.0
        %2230 = vmatpush1.msra.mxu0 %v1121
        %2231 = vmatprep.subr.mxu0 0.0
        %2232 = vmatpush1.msra.mxu0 %v1122
        %2233 = vmatprep.subr.mxu0 0.0
        %2234 = vmatpush1.msra.mxu0 %v1123
        %2235 = vmatprep.subr.mxu0 0.0
        %2236 = vmatpush1.msra.mxu0 %v1124
        %2237 = vmatprep.subr.mxu0 0.0
        %2238 = vmatpush1.msra.mxu0 %v2227
        %2239 = vmatprep.subr.mxu0 0.0
        %2240 = vmatpush1.msra.mxu0 0.0
        %2241 = vmatprep.subr.mxu0 0.0
        %2242 = vmatpush1.msra.mxu0 0.0
        %2243 = vmatprep.subr.mxu0 0.0
        %2244 = vmatpush1.msra.mxu0 0.0
        %2245 = vmatprep.subr.mxu0 0.0
        %2246 = vmatpush1.msra.mxu0 0.0
        %2247 = vmatprep.subr.mxu0 0.0
        %2248 = vmatpush1.msra.mxu0 0.0
        %2249 = vmatprep.subr.mxu0 0.0
        %2250 = vmatpush1.msra.mxu0 0.0
        %2251 = vmatprep.subr.mxu0 0.0
        %2252 = vmatpush1.msra.mxu0 0.0
        %2253 = vmatprep.subr.mxu0 0.0
        %2254 = vmatpush1.msra.mxu0 0.0
        %2255 = vmatprep.subr.mxu0 0.0
        %2256 = vmatpush1.msra.mxu0 0.0
        %2257 = vmatprep.subr.mxu0 0.0
        %2258 = vmatpush1.msra.mxu0 0.0
        %2259 = vmatprep.subr.mxu0 0.0
        %2260 = vmatpush1.msra.mxu0 0.0
        %2261 = vmatprep.subr.mxu0 0.0
        %2262 = vmatpush1.msra.mxu0 0.0
        %2263 = vmatprep.subr.mxu0 0.0
        %2264 = vmatpush1.msra.mxu0 0.0
        %2265 = vmatprep.subr.mxu0 0.0
        %2266 = vmatpush1.msra.mxu0 0.0
        %2267 = vmatprep.subr.mxu0 0.0
        %2268 = vmatpush1.msra.mxu0 0.0
        %2269 = vmatprep.subr.mxu0 0.0
        %2270 = vmatpush1.msra.mxu0 0.0
        %2271 = vmatprep.subr.mxu0 0.0
        %2272 = vmatpush1.msra.mxu0 0.0
        %2273 = vmatprep.subr.mxu0 0.0
        %2274 = vmatpush1.msra.mxu0 0.0
        %2275 = vmatprep.subr.mxu0 0.0
        %2276 = vmatpush1.msra.mxu0 0.0
        %2277 = vmatprep.subr.mxu0 0.0
        %2278 = vmatpush1.msra.mxu0 0.0
        %2279 = vmatprep.subr.mxu0 0.0
        %2280 = vmatpush1.msra.mxu0 0.0
        %2281 = vmatprep.subr.mxu0 0.0
        %2282 = vmatpush1.msra.mxu0 0.0
        %2283 = vmatprep.subr.mxu0 0.0
        %2284 = vmatpush1.msra.mxu0 0.0
        %2285 = vmatprep.subr.mxu0 0.0
        %2286 = vmatpush1.msra.mxu0 0.0
        %2287 = vmatprep.subr.mxu0 0.0
        %2288 = vmatpush1.msra.mxu0 0.0
        %2289 = vmatprep.subr.mxu0 0.0
        %2290 = vmatpush1.msra.mxu0 0.0
        %2291 = vmatprep.subr.mxu0 0.0
        %2292 = vmatpush1.msra.mxu0 0.0
        %2293 = vmatprep.mubr.f32.mxu0 0.0
        %2294 = vmatmul.mubr.f32.gmra.mrb[0].mxu0 %v1128
        %v2295 = vpop.f32.mrb[0].mxu0
        %v2296 = vadd.f32 0.0, %v2295
        %v2297 = vpop.f32.mrb[0].mxu0
        %2298 = vdwg.mxu0
        %v2299 = vld [vmem:[#allocation9] sm:$0xff]
        %v2300 = vld [vmem:[#allocation9 + $0x8] sm:$0xff]
        %s2301 = scalar_lea.vmem [#allocation9], 16
        %v2302 = vld [vmem:[%s2301] sm:$0xff]
        %v2303 = vld [vmem:[%s2301 + $0x8] sm:$0xff]
        %v2321 = vunpack.c.l.s4 1983009808
        %v2322 = vunpack.c.0.s8 %v2321
        %v2323 = vlaneseq
        %v2324 = vshrl.u32 %v2323, 7
        %v2325 = vsub.s32 %v2322, %v2324
        %v2326 = vrot.slane %v1201, %v2325
        %v2327 = vcombine.high %v2326, %v2326
        %v2329 = vunpack.c.l.s4 1983009808
        %v2330 = vunpack.c.0.s8 %v2329
        %v2331 = vlaneseq
        %v2332 = vshrl.u32 %v2331, 7
        %v2333 = vsub.s32 %v2330, %v2332
        %v2334 = vrot.slane %v1274, %v2333
        %v2335 = vcombine.high %v2334, %v2334
        %v2337 = vunpack.c.l.s4 1983009808
        %v2338 = vunpack.c.0.s8 %v2337
        %v2339 = vlaneseq
        %v2340 = vshrl.u32 %v2339, 7
        %v2341 = vsub.s32 %v2338, %v2340
        %v2342 = vrot.slane %v1347, %v2341
        %v2343 = vcombine.high %v2342, %v2342
        %v2345 = vunpack.c.l.s4 1983009808
        %v2346 = vunpack.c.0.s8 %v2345
        %v2347 = vlaneseq
        %v2348 = vshrl.u32 %v2347, 7
        %v2349 = vsub.s32 %v2346, %v2348
        %v2350 = vrot.slane %v1420, %v2349
        %v2351 = vcombine.high %v2350, %v2350
        %v2353 = vunpack.c.l.s4 1983009808
        %v2354 = vunpack.c.0.s8 %v2353
        %v2355 = vlaneseq
        %v2356 = vshrl.u32 %v2355, 7
        %v2357 = vsub.s32 %v2354, %v2356
        %v2358 = vrot.slane %v1493, %v2357
        %v2359 = vcombine.high %v2358, %v2358
        %v2361 = vunpack.c.l.s4 1983009808
        %v2362 = vunpack.c.0.s8 %v2361
        %v2363 = vlaneseq
        %v2364 = vshrl.u32 %v2363, 7
        %v2365 = vsub.s32 %v2362, %v2364
        %v2366 = vrot.slane %v1566, %v2365
        %v2367 = vcombine.high %v2366, %v2366
        %v2369 = vunpack.c.l.s4 1983009808
        %v2370 = vunpack.c.0.s8 %v2369
        %v2371 = vlaneseq
        %v2372 = vshrl.u32 %v2371, 7
        %v2373 = vsub.s32 %v2370, %v2372
        %v2374 = vrot.slane %v1639, %v2373
        %v2375 = vcombine.high %v2374, %v2374
        %v2377 = vunpack.c.l.s4 1983009808
        %v2378 = vunpack.c.0.s8 %v2377
        %v2379 = vlaneseq
        %v2380 = vshrl.u32 %v2379, 7
        %v2381 = vsub.s32 %v2378, %v2380
        %v2382 = vrot.slane %v1712, %v2381
        %v2383 = vcombine.high %v2382, %v2382
        %v2385 = vunpack.c.l.s4 1983009808
        %v2386 = vunpack.c.0.s8 %v2385
        %v2387 = vlaneseq
        %v2388 = vshrl.u32 %v2387, 7
        %v2389 = vsub.s32 %v2386, %v2388
        %v2390 = vrot.slane %v1785, %v2389
        %v2391 = vcombine.high %v2390, %v2390
        %v2393 = vunpack.c.l.s4 1983009808
        %v2394 = vunpack.c.0.s8 %v2393
        %v2395 = vlaneseq
        %v2396 = vshrl.u32 %v2395, 7
        %v2397 = vsub.s32 %v2394, %v2396
        %v2398 = vrot.slane %v1858, %v2397
        %v2399 = vcombine.high %v2398, %v2398
        %v2401 = vunpack.c.l.s4 1983009808
        %v2402 = vunpack.c.0.s8 %v2401
        %v2403 = vlaneseq
        %v2404 = vshrl.u32 %v2403, 7
        %v2405 = vsub.s32 %v2402, %v2404
        %v2406 = vrot.slane %v1931, %v2405
        %v2407 = vcombine.high %v2406, %v2406
        %v2409 = vunpack.c.l.s4 1983009808
        %v2410 = vunpack.c.0.s8 %v2409
        %v2411 = vlaneseq
        %v2412 = vshrl.u32 %v2411, 7
        %v2413 = vsub.s32 %v2410, %v2412
        %v2414 = vrot.slane %v2004, %v2413
        %v2415 = vcombine.high %v2414, %v2414
        %v2417 = vunpack.c.l.s4 1983009808
        %v2418 = vunpack.c.0.s8 %v2417
        %v2419 = vlaneseq
        %v2420 = vshrl.u32 %v2419, 7
        %v2421 = vsub.s32 %v2418, %v2420
        %v2422 = vrot.slane %v2077, %v2421
        %v2423 = vcombine.high %v2422, %v2422
        %v2425 = vunpack.c.l.s4 1983009808
        %v2426 = vunpack.c.0.s8 %v2425
        %v2427 = vlaneseq
        %v2428 = vshrl.u32 %v2427, 7
        %v2429 = vsub.s32 %v2426, %v2428
        %v2430 = vrot.slane %v2150, %v2429
        %v2431 = vcombine.high %v2430, %v2430
        %v2433 = vunpack.c.l.s4 1983009808
        %v2434 = vunpack.c.0.s8 %v2433
        %v2435 = vlaneseq
        %v2436 = vshrl.u32 %v2435, 7
        %v2437 = vsub.s32 %v2434, %v2436
        %v2438 = vrot.slane %v2223, %v2437
        %v2439 = vcombine.high %v2438, %v2438
        %v2441 = vunpack.c.l.s4 1983009808
        %v2442 = vunpack.c.0.s8 %v2441
        %v2443 = vlaneseq
        %v2444 = vshrl.u32 %v2443, 7
        %v2445 = vsub.s32 %v2442, %v2444
        %v2446 = vrot.slane %v2296, %v2445
        %v2447 = vcombine.high %v2446, %v2446
        %v2448 = vcombine.low %v2327, %v2335
        %v2449 = vcombine.low %v2343, %v2351
        %v2451 = vunpack.c.l.s4 1983009808
        %v2452 = vunpack.c.0.s8 %v2451
        %v2453 = vlaneseq
        %v2454 = vshrl.u32 %v2453, 7
        %v2455 = vsub.s32 %v2452, %v2454
        %v2456 = vrot.slane %v2448, %v2455
        %v2458 = vunpack.c.l.s4 1983009808
        %v2459 = vunpack.c.0.s8 %v2458
        %v2460 = vlaneseq
        %v2461 = vshrl.u32 %v2460, 7
        %v2462 = vsub.s32 %v2459, %v2461
        %v2463 = vrot.slane %v2449, %v2462
        %v2464 = vcombine.low %v2456, %v2463
        %v2465 = vcombine.low %v2359, %v2367
        %v2466 = vcombine.low %v2375, %v2383
        %v2468 = vunpack.c.l.s4 1983009808
        %v2469 = vunpack.c.0.s8 %v2468
        %v2470 = vlaneseq
        %v2471 = vshrl.u32 %v2470, 7
        %v2472 = vsub.s32 %v2469, %v2471
        %v2473 = vrot.slane %v2465, %v2472
        %v2475 = vunpack.c.l.s4 1983009808
        %v2476 = vunpack.c.0.s8 %v2475
        %v2477 = vlaneseq
        %v2478 = vshrl.u32 %v2477, 7
        %v2479 = vsub.s32 %v2476, %v2478
        %v2480 = vrot.slane %v2466, %v2479
        %v2481 = vcombine.low %v2473, %v2480
        %v2482 = vcombine.low %v2391, %v2399
        %v2483 = vcombine.low %v2407, %v2415
        %v2485 = vunpack.c.l.s4 1983009808
        %v2486 = vunpack.c.0.s8 %v2485
        %v2487 = vlaneseq
        %v2488 = vshrl.u32 %v2487, 7
        %v2489 = vsub.s32 %v2486, %v2488
        %v2490 = vrot.slane %v2482, %v2489
        %v2492 = vunpack.c.l.s4 1983009808
        %v2493 = vunpack.c.0.s8 %v2492
        %v2494 = vlaneseq
        %v2495 = vshrl.u32 %v2494, 7
        %v2496 = vsub.s32 %v2493, %v2495
        %v2497 = vrot.slane %v2483, %v2496
        %v2498 = vcombine.low %v2490, %v2497
        %v2499 = vcombine.low %v2423, %v2431
        %v2500 = vcombine.low %v2439, %v2447
        %v2502 = vunpack.c.l.s4 1983009808
        %v2503 = vunpack.c.0.s8 %v2502
        %v2504 = vlaneseq
        %v2505 = vshrl.u32 %v2504, 7
        %v2506 = vsub.s32 %v2503, %v2505
        %v2507 = vrot.slane %v2499, %v2506
        %v2509 = vunpack.c.l.s4 1983009808
        %v2510 = vunpack.c.0.s8 %v2509
        %v2511 = vlaneseq
        %v2512 = vshrl.u32 %v2511, 7
        %v2513 = vsub.s32 %v2510, %v2512
        %v2514 = vrot.slane %v2500, %v2513
        %v2515 = vcombine.low %v2507, %v2514
        %vm2516 = vcmask 130048
        %v2517 = vsel %vm2516, %v2464, 0
        %v2519 = vsel %vm2516, %v2481, 0
        %v2521 = vsel %vm2516, %v2498, 0
        %v2523 = vsel %vm2516, %v2515, 0
        %2525 = vmatprep.subr.mxu0 0.0
        %2526 = vmatpush1.msra.mxu0 %v2302
        %2527 = vmatprep.subr.mxu0 0.0
        %2528 = vmatpush1.msra.mxu0 %v2303
        %2529 = vmatprep.subr.mxu0 0.0
        %2530 = vmatpush1.msra.mxu0 0.0
        %2531 = vmatprep.subr.mxu0 0.0
        %2532 = vmatpush1.msra.mxu0 0.0
        %2533 = vmatprep.subr.mxu0 0.0
        %2534 = vmatpush1.msra.mxu0 0.0
        %2535 = vmatprep.subr.mxu0 0.0
        %2536 = vmatpush1.msra.mxu0 0.0
        %2537 = vmatprep.subr.mxu0 0.0
        %2538 = vmatpush1.msra.mxu0 0.0
        %2539 = vmatprep.subr.mxu0 0.0
        %2540 = vmatpush1.msra.mxu0 0.0
        %2541 = vmatprep.subr.mxu0 0.0
        %2542 = vmatpush1.msra.mxu0 0.0
        %2543 = vmatprep.subr.mxu0 0.0
        %2544 = vmatpush1.msra.mxu0 0.0
        %2545 = vmatprep.subr.mxu0 0.0
        %2546 = vmatpush1.msra.mxu0 0.0
        %2547 = vmatprep.subr.mxu0 0.0
        %2548 = vmatpush1.msra.mxu0 0.0
        %2549 = vmatprep.subr.mxu0 0.0
        %2550 = vmatpush1.msra.mxu0 0.0
        %2551 = vmatprep.subr.mxu0 0.0
        %2552 = vmatpush1.msra.mxu0 0.0
        %2553 = vmatprep.subr.mxu0 0.0
        %2554 = vmatpush1.msra.mxu0 0.0
        %2555 = vmatprep.subr.mxu0 0.0
        %2556 = vmatpush1.msra.mxu0 0.0
        %2557 = vmatprep.subr.mxu0 0.0
        %2558 = vmatpush1.msra.mxu0 0.0
        %2559 = vmatprep.subr.mxu0 0.0
        %2560 = vmatpush1.msra.mxu0 0.0
        %2561 = vmatprep.subr.mxu0 0.0
        %2562 = vmatpush1.msra.mxu0 0.0
        %2563 = vmatprep.subr.mxu0 0.0
        %2564 = vmatpush1.msra.mxu0 0.0
        %2565 = vmatprep.subr.mxu0 0.0
        %2566 = vmatpush1.msra.mxu0 0.0
        %2567 = vmatprep.subr.mxu0 0.0
        %2568 = vmatpush1.msra.mxu0 0.0
        %2569 = vmatprep.subr.mxu0 0.0
        %2570 = vmatpush1.msra.mxu0 0.0
        %2571 = vmatprep.subr.mxu0 0.0
        %2572 = vmatpush1.msra.mxu0 0.0
        %2573 = vmatprep.subr.mxu0 0.0
        %2574 = vmatpush1.msra.mxu0 0.0
        %2575 = vmatprep.subr.mxu0 0.0
        %2576 = vmatpush1.msra.mxu0 0.0
        %2577 = vmatprep.subr.mxu0 0.0
        %2578 = vmatpush1.msra.mxu0 0.0
        %2579 = vmatprep.subr.mxu0 0.0
        %2580 = vmatpush1.msra.mxu0 0.0
        %2581 = vmatprep.subr.mxu0 0.0
        %2582 = vmatpush1.msra.mxu0 0.0
        %2583 = vmatprep.subr.mxu0 0.0
        %2584 = vmatpush1.msra.mxu0 0.0
        %2585 = vmatprep.subr.mxu0 0.0
        %2586 = vmatpush1.msra.mxu0 0.0
        %2587 = vmatprep.subr.mxu0 0.0
        %2588 = vmatpush1.msra.mxu0 0.0
        %2589 = vmatprep.mubr.f32.mxu0 0.0
        %2590 = vmatmul.mubr.f32.gmra.mrb[0].mxu0 %v2517
        %v2591 = vpop.f32.mrb[0].mxu0
        %v2592 = vadd.f32 0.0, %v2591
        %v2593 = vpop.f32.mrb[0].mxu0
        %2594 = vmatprep.mubr.f32.mxu0 0.0
        %2595 = vmatmul.mubr.f32.gmra.mrb[0].mxu0 %v2519
        %v2596 = vpop.f32.mrb[0].mxu0
        %v2597 = vadd.f32 0.0, %v2596
        %v2598 = vpop.f32.mrb[0].mxu0
        %2599 = vmatprep.mubr.f32.mxu0 0.0
        %2600 = vmatmul.mubr.f32.gmra.mrb[0].mxu0 %v2521
        %v2601 = vpop.f32.mrb[0].mxu0
        %v2602 = vadd.f32 0.0, %v2601
        %v2603 = vpop.f32.mrb[0].mxu0
        %2604 = vmatprep.mubr.f32.mxu0 0.0
        %2605 = vmatmul.mubr.f32.gmra.mrb[0].mxu0 %v2523
        %v2606 = vpop.f32.mrb[0].mxu0
        %v2607 = vadd.f32 0.0, %v2606
        %v2608 = vpop.f32.mrb[0].mxu0
        %2609 = vdwg.mxu0
        %v2610 = vcombine.low %v1201, %v1274
        %v2611 = vcombine.low %v1347, %v1420
        %v2613 = vunpack.c.l.s4 1983009808
        %v2614 = vunpack.c.0.s8 %v2613
        %v2615 = vlaneseq
        %v2616 = vshrl.u32 %v2615, 7
        %v2617 = vsub.s32 %v2614, %v2616
        %v2618 = vrot.slane %v2610, %v2617
        %v2620 = vunpack.c.l.s4 1983009808
        %v2621 = vunpack.c.0.s8 %v2620
        %v2622 = vlaneseq
        %v2623 = vshrl.u32 %v2622, 7
        %v2624 = vsub.s32 %v2621, %v2623
        %v2625 = vrot.slane %v2611, %v2624
        %v2626 = vcombine.low %v2618, %v2625
        %v2627 = vcombine.low %v1493, %v1566
        %v2628 = vcombine.low %v1639, %v1712
        %v2630 = vunpack.c.l.s4 1983009808
        %v2631 = vunpack.c.0.s8 %v2630
        %v2632 = vlaneseq
        %v2633 = vshrl.u32 %v2632, 7
        %v2634 = vsub.s32 %v2631, %v2633
        %v2635 = vrot.slane %v2627, %v2634
        %v2637 = vunpack.c.l.s4 1983009808
        %v2638 = vunpack.c.0.s8 %v2637
        %v2639 = vlaneseq
        %v2640 = vshrl.u32 %v2639, 7
        %v2641 = vsub.s32 %v2638, %v2640
        %v2642 = vrot.slane %v2628, %v2641
        %v2643 = vcombine.low %v2635, %v2642
        %v2644 = vcombine.low %v1785, %v1858
        %v2645 = vcombine.low %v1931, %v2004
        %v2647 = vunpack.c.l.s4 1983009808
        %v2648 = vunpack.c.0.s8 %v2647
        %v2649 = vlaneseq
        %v2650 = vshrl.u32 %v2649, 7
        %v2651 = vsub.s32 %v2648, %v2650
        %v2652 = vrot.slane %v2644, %v2651
        %v2654 = vunpack.c.l.s4 1983009808
        %v2655 = vunpack.c.0.s8 %v2654
        %v2656 = vlaneseq
        %v2657 = vshrl.u32 %v2656, 7
        %v2658 = vsub.s32 %v2655, %v2657
        %v2659 = vrot.slane %v2645, %v2658
        %v2660 = vcombine.low %v2652, %v2659
        %v2661 = vcombine.low %v2077, %v2150
        %v2662 = vcombine.low %v2223, %v2296
        %v2664 = vunpack.c.l.s4 1983009808
        %v2665 = vunpack.c.0.s8 %v2664
        %v2666 = vlaneseq
        %v2667 = vshrl.u32 %v2666, 7
        %v2668 = vsub.s32 %v2665, %v2667
        %v2669 = vrot.slane %v2661, %v2668
        %v2671 = vunpack.c.l.s4 1983009808
        %v2672 = vunpack.c.0.s8 %v2671
        %v2673 = vlaneseq
        %v2674 = vshrl.u32 %v2673, 7
        %v2675 = vsub.s32 %v2672, %v2674
        %v2676 = vrot.slane %v2662, %v2675
        %v2677 = vcombine.low %v2669, %v2676
        %v2678 = vsel %vm2516, %v2626, 0
        %v2680 = vsel %vm2516, %v2643, 0
        %v2682 = vsel %vm2516, %v2660, 0
        %v2684 = vsel %vm2516, %v2677, 0
        %2686 = vmatprep.subr.mxu0 0.0
        %2687 = vmatpush1.msra.mxu0 %v2299
        %2688 = vmatprep.subr.mxu0 0.0
        %2689 = vmatpush1.msra.mxu0 %v2300
        %2690 = vmatprep.subr.mxu0 0.0
        %2691 = vmatpush1.msra.mxu0 0.0
        %2692 = vmatprep.subr.mxu0 0.0
        %2693 = vmatpush1.msra.mxu0 0.0
        %2694 = vmatprep.subr.mxu0 0.0
        %2695 = vmatpush1.msra.mxu0 0.0
        %2696 = vmatprep.subr.mxu0 0.0
        %2697 = vmatpush1.msra.mxu0 0.0
        %2698 = vmatprep.subr.mxu0 0.0
        %2699 = vmatpush1.msra.mxu0 0.0
        %2700 = vmatprep.subr.mxu0 0.0
        %2701 = vmatpush1.msra.mxu0 0.0
        %2702 = vmatprep.subr.mxu0 0.0
        %2703 = vmatpush1.msra.mxu0 0.0
        %2704 = vmatprep.subr.mxu0 0.0
        %2705 = vmatpush1.msra.mxu0 0.0
        %2706 = vmatprep.subr.mxu0 0.0
        %2707 = vmatpush1.msra.mxu0 0.0
        %2708 = vmatprep.subr.mxu0 0.0
        %2709 = vmatpush1.msra.mxu0 0.0
        %2710 = vmatprep.subr.mxu0 0.0
        %2711 = vmatpush1.msra.mxu0 0.0
        %2712 = vmatprep.subr.mxu0 0.0
        %2713 = vmatpush1.msra.mxu0 0.0
        %2714 = vmatprep.subr.mxu0 0.0
        %2715 = vmatpush1.msra.mxu0 0.0
        %2716 = vmatprep.subr.mxu0 0.0
        %2717 = vmatpush1.msra.mxu0 0.0
        %2718 = vmatprep.subr.mxu0 0.0
        %2719 = vmatpush1.msra.mxu0 0.0
        %2720 = vmatprep.subr.mxu0 0.0
        %2721 = vmatpush1.msra.mxu0 0.0
        %2722 = vmatprep.subr.mxu0 0.0
        %2723 = vmatpush1.msra.mxu0 0.0
        %2724 = vmatprep.subr.mxu0 0.0
        %2725 = vmatpush1.msra.mxu0 0.0
        %2726 = vmatprep.subr.mxu0 0.0
        %2727 = vmatpush1.msra.mxu0 0.0
        %2728 = vmatprep.subr.mxu0 0.0
        %2729 = vmatpush1.msra.mxu0 0.0
        %2730 = vmatprep.subr.mxu0 0.0
        %2731 = vmatpush1.msra.mxu0 0.0
        %2732 = vmatprep.subr.mxu0 0.0
        %2733 = vmatpush1.msra.mxu0 0.0
        %2734 = vmatprep.subr.mxu0 0.0
        %2735 = vmatpush1.msra.mxu0 0.0
        %2736 = vmatprep.subr.mxu0 0.0
        %2737 = vmatpush1.msra.mxu0 0.0
        %2738 = vmatprep.subr.mxu0 0.0
        %2739 = vmatpush1.msra.mxu0 0.0
        %2740 = vmatprep.subr.mxu0 0.0
        %2741 = vmatpush1.msra.mxu0 0.0
        %2742 = vmatprep.subr.mxu0 0.0
        %2743 = vmatpush1.msra.mxu0 0.0
        %2744 = vmatprep.subr.mxu0 0.0
        %2745 = vmatpush1.msra.mxu0 0.0
        %2746 = vmatprep.subr.mxu0 0.0
        %2747 = vmatpush1.msra.mxu0 0.0
        %2748 = vmatprep.subr.mxu0 0.0
        %2749 = vmatpush1.msra.mxu0 0.0
        %2750 = vmatprep.mubr.f32.mxu0 0.0
        %2751 = vmatmul.mubr.f32.gmra.mrb[0].mxu0 %v2678
        %v2752 = vpop.f32.mrb[0].mxu0
        %v2753 = vadd.f32 %v2592, %v2752
        %v2754 = vpop.f32.mrb[0].mxu0
        %2755 = vmatprep.mubr.f32.mxu0 0.0
        %2756 = vmatmul.mubr.f32.gmra.mrb[0].mxu0 %v2680
        %v2757 = vpop.f32.mrb[0].mxu0
        %v2758 = vadd.f32 %v2597, %v2757
        %v2759 = vpop.f32.mrb[0].mxu0
        %2760 = vmatprep.mubr.f32.mxu0 0.0
        %2761 = vmatmul.mubr.f32.gmra.mrb[0].mxu0 %v2682
        %v2762 = vpop.f32.mrb[0].mxu0
        %v2763 = vadd.f32 %v2602, %v2762
        %v2764 = vpop.f32.mrb[0].mxu0
        %2765 = vmatprep.mubr.f32.mxu0 0.0
        %2766 = vmatmul.mubr.f32.gmra.mrb[0].mxu0 %v2684
        %v2767 = vpop.f32.mrb[0].mxu0
        %v2768 = vadd.f32 %v2607, %v2767
        %v2769 = vpop.f32.mrb[0].mxu0
        %2770 = vdwg.mxu0
        %v2775 = vcombine.high %v2753, %v2753
        %v2777 = vunpack.c.l.s4 1983009808
        %v2778 = vunpack.c.0.s8 %v2777
        %v2779 = vlaneseq
        %v2780 = vshrl.u32 %v2779, 7
        %v2781 = vsub.s32 %v2778, %v2780
        %v2782 = vrot.slane %v2753, %v2781
        %v2784 = vunpack.c.l.s4 1983009808
        %v2785 = vunpack.c.0.s8 %v2784
        %v2786 = vlaneseq
        %v2787 = vshrl.u32 %v2786, 7
        %v2788 = vsub.s32 %v2785, %v2787
        %v2789 = vrot.slane %v2775, %v2788
        %v2790 = vcombine.high %v2782, %v2782
        %v2791 = vcombine.high %v2789, %v2789
        %v2792 = vcombine.high %v2758, %v2758
        %v2794 = vunpack.c.l.s4 1983009808
        %v2795 = vunpack.c.0.s8 %v2794
        %v2796 = vlaneseq
        %v2797 = vshrl.u32 %v2796, 7
        %v2798 = vsub.s32 %v2795, %v2797
        %v2799 = vrot.slane %v2758, %v2798
        %v2801 = vunpack.c.l.s4 1983009808
        %v2802 = vunpack.c.0.s8 %v2801
        %v2803 = vlaneseq
        %v2804 = vshrl.u32 %v2803, 7
        %v2805 = vsub.s32 %v2802, %v2804
        %v2806 = vrot.slane %v2792, %v2805
        %v2807 = vcombine.high %v2799, %v2799
        %v2808 = vcombine.high %v2806, %v2806
        %v2809 = vcombine.high %v2763, %v2763
        %v2811 = vunpack.c.l.s4 1983009808
        %v2812 = vunpack.c.0.s8 %v2811
        %v2813 = vlaneseq
        %v2814 = vshrl.u32 %v2813, 7
        %v2815 = vsub.s32 %v2812, %v2814
        %v2816 = vrot.slane %v2763, %v2815
        %v2818 = vunpack.c.l.s4 1983009808
        %v2819 = vunpack.c.0.s8 %v2818
        %v2820 = vlaneseq
        %v2821 = vshrl.u32 %v2820, 7
        %v2822 = vsub.s32 %v2819, %v2821
        %v2823 = vrot.slane %v2809, %v2822
        %v2824 = vcombine.high %v2816, %v2816
        %v2825 = vcombine.high %v2823, %v2823
        %v2826 = vcombine.high %v2768, %v2768
        %v2828 = vunpack.c.l.s4 1983009808
        %v2829 = vunpack.c.0.s8 %v2828
        %v2830 = vlaneseq
        %v2831 = vshrl.u32 %v2830, 7
        %v2832 = vsub.s32 %v2829, %v2831
        %v2833 = vrot.slane %v2768, %v2832
        %v2835 = vunpack.c.l.s4 1983009808
        %v2836 = vunpack.c.0.s8 %v2835
        %v2837 = vlaneseq
        %v2838 = vshrl.u32 %v2837, 7
        %v2839 = vsub.s32 %v2836, %v2838
        %v2840 = vrot.slane %v2826, %v2839
        %v2841 = vcombine.high %v2833, %v2833
        %v2842 = vcombine.high %v2840, %v2840
        %vm2859 = vcmask 254976
        %2860 = vst.msk [vmem:[%s253] sm:$0x3] %vm2859, %v2782
        %2861 = vst.msk [vmem:[%s253 + $0x2] sm:$0x3] %vm2859, %v2790
        %2862 = vst.msk [vmem:[%s253 + $0x4] sm:$0x3] %vm2859, %v2789
        %2863 = vst.msk [vmem:[%s253 + $0x6] sm:$0x3] %vm2859, %v2791
        %2864 = vst.msk [vmem:[%s253 + $0x8] sm:$0x3] %vm2859, %v2799
        %2865 = vst.msk [vmem:[%s253 + $0xa] sm:$0x3] %vm2859, %v2807
        %2866 = vst.msk [vmem:[%s253 + $0xc] sm:$0x3] %vm2859, %v2806
        %2867 = vst.msk [vmem:[%s253 + $0xe] sm:$0x3] %vm2859, %v2808
        %2868 = vst.msk [vmem:[%s253 + $0x10] sm:$0x3] %vm2859, %v2816
        %2869 = vst.msk [vmem:[%s253 + $0x12] sm:$0x3] %vm2859, %v2824
        %2870 = vst.msk [vmem:[%s253 + $0x14] sm:$0x3] %vm2859, %v2823
        %2871 = vst.msk [vmem:[%s253 + $0x16] sm:$0x3] %vm2859, %v2825
        %2872 = vst.msk [vmem:[%s253 + $0x18] sm:$0x3] %vm2859, %v2833
        %2873 = vst.msk [vmem:[%s253 + $0x1a] sm:$0x3] %vm2859, %v2841
        %2874 = vst.msk [vmem:[%s253 + $0x1c] sm:$0x3] %vm2859, %v2840
        %2875 = vst.msk [vmem:[%s253 + $0x1e] sm:$0x3] %vm2859, %v2842
        %s2876 = sand.u32 %s118, 1
        %s2877 = scalar_lea.sflag [#allocation6], %s2876
        %s2878 = sand.u32 %s118, 1
        %s2879 = smul.addr %s2878, 32
        %s2880 = scalar_lea.vmem [#allocation10], %s2879
        // Predicated region
        $region45: #{tpu_custom_call.1} parent=31 // pred_check
          %p2881 = pneg %p128
        $region46: #{tpu_custom_call.1} parent=31 // pred_check_branch
          %2883 = sbr.rel (%p2881) target = $region48
        $region47: #{tpu_custom_call.1} parent=31 // pred_region
          %s2885 = ssub.s32 512, 512
          %2886 = vsyncadd %s2877, %s2885
          %s2887 = smul.addr %s28, 16
          %s2888 = smul.addr %s27, 64
          %s2889 = sadd.s32 %s2887, %s2888
          %s2890 = smul.addr %s2889, 32
          %s2891 = scalar_lea.hbm %s3, %s2890
          %s2892 = sshll.u32 %s2880, 4
          %s2893 = int_to_ptr.vmem [resolvable:$true] %s2892
          %2898 = dma.vmem_to_hbm [thread:$0]  %s2893, 512, %s2891, %s2877, 32, 32, 2
        $region48: #{tpu_custom_call.1} parent=31 // pred_fallthru
          _
      $region32: #{tpu_custom_call.1} parent=5 // pred_fallthru
        _
      %p2899 = scmp.le.s32.totalorder 2, %s18
      // Predicated region
      $region49: #{tpu_custom_call.1} parent=5 // pred_check
        %p2900 = pneg %p2899
      $region50: #{tpu_custom_call.1} parent=5 // pred_check_branch
        %2902 = sbr.rel (%p2900) target = $region52
      $region51: #{tpu_custom_call.1} parent=5 // pred_region
        %s2903 = ssub.s32 %s18, 2
        // Predicated region
        $region53: #{tpu_custom_call.1} parent=51 // pred_check
          %p2904 = pneg %p134
        $region54: #{tpu_custom_call.1} parent=51 // pred_check_branch
          %2906 = sbr.rel (%p2904) target = $region56
        $region55: #{tpu_custom_call.1} parent=51 // pred_region
          %s2907 = sand.u32 %s119, 1
          %s2908 = scalar_lea.sflag [#allocation6], %s2907
          %s2909 = sand.u32 %s119, 1
          %s2910 = smul.addr %s2909, 32
          %s2911 = scalar_lea.vmem [#allocation10], %s2910
          %2912 = dma.done %s2908, 512
        $region56: #{tpu_custom_call.1} parent=51 // pred_fallthru
          _
      $region52: #{tpu_custom_call.1} parent=5 // pred_fallthru
        _
    $region6: #{tpu_custom_call.1} parent=1 // loop_footer
      %s22 = sadd.s32 1, %s18
    $region7: #{tpu_custom_call.1} parent=1 // loop_footer_branch
      %17 = sbr.rel target = $region3
    $region8: #{tpu_custom_call.1} parent=1 // loop_exit
      _
    %2913 = vsyncpa [#allocation5], 1
    %s2914 = scalar_lea.sflag [#allocation5], 1
    %2915 = vsyncpa %s2914, 1
    %2916 = vsyncpa [#allocation8], 1
    %s2917 = scalar_lea.sflag [#allocation8], 1
    %2918 = vsyncpa %s2917, 1
    %2919 = vsyncpa [#allocation6], 1
    %s2920 = scalar_lea.sflag [#allocation6], 1
    %2921 = vsyncpa %s2920, 1

</llo_original>
